<compile_context>
chip_gen: v7x
topology: tpu7x:2x2x1
jax: 0.10.0
libtpu: 0.0.40
codegen_flags: <defaults>
</compile_context>

<pallas_src>
import jax
import jax.numpy as jnp
from jax.experimental import pallas as pl
from jax.experimental.pallas import tpu as pltpu


# ------------------------------------------------------------------ kernel

def _make_fused_kernel(cfg):
    """cfg: tuple of (heads, f_out) per layer (static)."""

    def kernel(x_ref, adjb_ref,
               w1_ref, a1_ref, s1_ref, t1_ref,
               w2_ref, a2_ref, s2_ref, t2_ref,
               w3_ref, a3_ref, s3_ref, t3_ref,
               out_ref, acc_ref):
        # One bf16 -> f32 convert of the mask, reused by every layer/head.
        adjb = adjb_ref[...].astype(jnp.float32)            # (N, N), 0 / -1e30
        h = x_ref[...]
        layer_refs = ((w1_ref, a1_ref, s1_ref, t1_ref),
                      (w2_ref, a2_ref, s2_ref, t2_ref),
                      (w3_ref, a3_ref, s3_ref, t3_ref))
        for (heads, f_out), (w, a, s, t) in zip(cfg, layer_refs):
            # One wide MXU matmul for all heads.
            hw = jnp.dot(h, w[...], preferred_element_type=jnp.float32)      # (N, H*F)
            # Attention-score reductions on the MXU.
            scores = jnp.dot(hw, a[...], preferred_element_type=jnp.float32)  # (N, 2H)

            for hd in range(heads):
                a_dst = scores[:, hd:hd + 1]                                  # (N, 1)
                a_src = scores[:, heads + hd:heads + hd + 1]                  # (N, 1)
                e = a_dst + jnp.transpose(a_src)                              # (N_dst, N_src)
                e = jnp.maximum(e, 0.2 * e)                                   # LeakyReLU(0.2)
                e = e + adjb                                                  # additive mask
                m = jnp.max(e, axis=-1, keepdims=True)
                p = jnp.exp(e - m)                                            # masked -> 0
                rowsum = jnp.sum(p, axis=-1, keepdims=True)
                # Aggregate first, normalize after (EUP approx reciprocal).
                out_h = jnp.dot(p, hw[:, hd * f_out:(hd + 1) * f_out],
                                preferred_element_type=jnp.float32)           # (N, F)
                acc_ref[:, hd * f_out:(hd + 1) * f_out] = (
                    out_h * pl.reciprocal(rowsum, approx=True))

            c = heads * f_out
            # Folded conv-bias + eval BatchNorm + ReLU on the whole slab.
            h = jnp.maximum(acc_ref[:, :c] * s[...] + t[...], 0.0)
        out_ref[...] = h                                                      # (N, 128) lane-dense
    return kernel


# ----------------------------------------------------------------- wrapper

def _fold_layer(W, att_src, att_dst, bias, gamma, beta, mean, var, eps=1e-5):
    """Stack heads + fold conv bias and eval-mode BN into scale/shift."""
    H, F_in, F_out = W.shape
    C = H * F_out
    W_cat = jnp.transpose(W, (1, 0, 2)).reshape(F_in, C)
    A = jnp.zeros((C, 2 * H), jnp.float32)
    for h in range(H):
        A = A.at[h * F_out:(h + 1) * F_out, h].set(att_dst[h].reshape(F_out))
        A = A.at[h * F_out:(h + 1) * F_out, H + h].set(att_src[h].reshape(F_out))
    scale = gamma * jax.lax.rsqrt(var + eps)
    shift = beta + (bias - mean) * scale
    return W_cat, A, scale.reshape(1, -1), shift.reshape(1, -1)


def _pad_last_layer(folded, pad_to):
    """Zero-pad a (heads=1) folded layer to `pad_to` output channels so the
    final store is an unmasked, lane-dense 128-wide vst."""
    W_cat, A, scale, shift = folded
    c = W_cat.shape[1]
    pad = pad_to - c
    if pad <= 0:
        return folded, c
    W_cat = jnp.pad(W_cat, ((0, 0), (0, pad)))
    A = jnp.pad(A, ((0, pad), (0, 0)))
    scale = jnp.pad(scale, ((0, 0), (0, pad)))
    shift = jnp.pad(shift, ((0, 0), (0, pad)))
    return (W_cat, A, scale, shift), pad_to


def _pick_vmem_limit():
    """Explicit per-generation VMEM limit (defaults are only 16/32 MiB)."""
    cap = 64 << 20
    try:
        info = pltpu.get_tpu_info()
        cap = getattr(info, "vmem_capacity_bytes", cap) or cap
    except Exception:
        pass
    # leave ~8 MiB headroom; cap the request at ~100 MiB (v5e/v6e have 128).
    return int(min(max(cap - (8 << 20), 16 << 20), 100 << 20))


def gat_l3_forward(x, adj, p):
    N = x.shape[0]
    # bf16 mask halves the largest HBM read / VMEM resident; -1e30 is
    # representable in bf16 (8-bit exponent) and still drives exp() to 0.
    adj_bias = jnp.where(adj > 0, 0.0, -1e30).astype(jnp.bfloat16)

    l1 = _fold_layer(p["W1"], p["as1"], p["ad1"], p["b1"], p["g1"], p["be1"], p["m1"], p["v1"])
    l2 = _fold_layer(p["W2"], p["as2"], p["ad2"], p["b2"], p["g2"], p["be2"], p["m2"], p["v2"])
    l3 = _fold_layer(p["W3"], p["as3"], p["ad3"], p["b3"], p["g3"], p["be3"], p["m3"], p["v3"])

    heads3 = p["W3"].shape[0]
    # Only concat semantics (or single-head, where concat==mean) are folded.
    assert heads3 == 1, "conv3 with heads>1/concat=False (mean) not implemented"

    out_dim = p["W3"].shape[2]              # conv3: heads=1, concat=False
    PAD = 128                               # lane-dense output slab width
    l3, f_out3 = _pad_last_layer(l3, PAD)

    cfg = ((p["W1"].shape[0], p["W1"].shape[2]),
           (p["W2"].shape[0], p["W2"].shape[2]),
           (1, f_out3))

    args = (x, adj_bias) + l1 + l2 + l3      # all rank-2 arrays
    in_specs = [pl.BlockSpec(a.shape, lambda i: (0, 0)) for a in args]

    out = pl.pallas_call(
        _make_fused_kernel(cfg),
        out_shape=jax.ShapeDtypeStruct((N, f_out3), jnp.float32),
        grid=(1,),
        in_specs=in_specs,
        out_specs=pl.BlockSpec((N, f_out3), lambda i: (0, 0)),
        scratch_shapes=[pltpu.VMEM((N, f_out3), jnp.float32)],
        compiler_params=pltpu.CompilerParams(
            dimension_semantics=("arbitrary",),
            vmem_limit_bytes=_pick_vmem_limit()),
    )(*args)
    return out[:, :out_dim]


# ------------------------------------------------------------ pure-JAX reference

def _gat_conv_ref(x, adj, W, a_s, a_d, bias, concat):
    outs = []
    for h in range(W.shape[0]):
        hf = x @ W[h]
        asrc = (hf * a_s[h]).sum(-1)
        adst = (hf * a_d[h]).sum(-1)
        e = adst[:, None] + asrc[None, :]
        e = jnp.where(e >= 0, e, 0.2 * e)
        e = jnp.where(adj > 0, e, -1e30)
        attn = jax.nn.softmax(e, axis=-1)
        outs.append(attn @ hf)
    out = jnp.concatenate(outs, -1) if concat else jnp.mean(jnp.stack(outs), 0)
    return out + bias[None, :]


def _bn_relu_ref(x, g, b, mu, v):
    return jnp.maximum((x - mu) / jnp.sqrt(v + 1e-5) * g + b, 0.0)


def _forward_ref(x, adj, p):
    h = _gat_conv_ref(x, adj, p["W1"], p["as1"], p["ad1"], p["b1"], True)
    h = _bn_relu_ref(h, p["g1"], p["be1"], p["m1"], p["v1"])
    h = _gat_conv_ref(h, adj, p["W2"], p["as2"], p["ad2"], p["b2"], True)
    h = _bn_relu_ref(h, p["g2"], p["be2"], p["m2"], p["v2"])
    h = _gat_conv_ref(h, adj, p["W3"], p["as3"], p["ad3"], p["b3"], False)
    h = _bn_relu_ref(h, p["g3"], p["be3"], p["m3"], p["v3"])
    return h


# ----------------------------------------------------------------------- main

if __name__ == "__main__":
    key = jax.random.PRNGKey(0)
    N, input_dim, hidden_dim, output_dim, heads = 16, 8, 16, 8, 2

    ks = jax.random.split(key, 24)
    glorot = lambda k, shape: jax.random.normal(k, shape, jnp.float32) * (
        2.0 / (shape[-2] + shape[-1])) ** 0.5

    C = hidden_dim * heads
    params = dict(
        # conv1: GATConv(input_dim, hidden_dim, heads=2, concat=True)
        W1=glorot(ks[0], (heads, input_dim, hidden_dim)),
        as1=glorot(ks[1], (heads, 1, hidden_dim)),
        ad1=glorot(ks[2], (heads, 1, hidden_dim)),
        b1=jax.random.normal(ks[3], (C,), jnp.float32) * 0.1,
        g1=1.0 + 0.1 * jax.random.normal(ks[4], (C,), jnp.float32),
        be1=0.1 * jax.random.normal(ks[5], (C,), jnp.float32),
        m1=0.1 * jax.random.normal(ks[6], (C,), jnp.float32),
        v1=0.5 + jnp.abs(jax.random.normal(ks[7], (C,), jnp.float32)),
        # conv2: GATConv(C, hidden_dim, heads=2, concat=True)
        W2=glorot(ks[8], (heads, C, hidden_dim)),
        as2=glorot(ks[9], (heads, 1, hidden_dim)),
        ad2=glorot(ks[10], (heads, 1, hidden_dim)),
        b2=jax.random.normal(ks[11], (C,), jnp.float32) * 0.1,
        g2=1.0 + 0.1 * jax.random.normal(ks[12], (C,), jnp.float32),
        be2=0.1 * jax.random.normal(ks[13], (C,), jnp.float32),
        m2=0.1 * jax.random.normal(ks[14], (C,), jnp.float32),
        v2=0.5 + jnp.abs(jax.random.normal(ks[15], (C,), jnp.float32)),
        # conv3: GATConv(C, output_dim, heads=1, concat=False)
        W3=glorot(ks[16], (1, C, output_dim)),
        as3=glorot(ks[17], (1, 1, output_dim)),
        ad3=glorot(ks[18], (1, 1, output_dim)),
        b3=jax.random.normal(ks[19], (output_dim,), jnp.float32) * 0.1,
        g3=1.0 + 0.1 * jax.random.normal(ks[20], (output_dim,), jnp.float32),
        be3=0.1 * jax.random.normal(ks[21], (output_dim,), jnp.float32),
        m3=0.1 * jax.random.normal(ks[22], (output_dim,), jnp.float32),
        v3=0.5 + jnp.abs(jax.random.normal(ks[23], (output_dim,), jnp.float32)),
    )

    # node features
    x = jax.random.normal(jax.random.PRNGKey(1), (N, input_dim), jnp.float32)

    # deterministic ring graph, both directions -> edge_index (2, 2N)
    arange = jnp.arange(N)
    src = jnp.concatenate([arange, (arange + 1) % N])
    dst = jnp.concatenate([(arange + 1) % N, arange])
    edge_index = jnp.stack([src, dst])

    # dense adjacency adj[dst, src], plus self-loops (GATConv default)
    adj = jnp.zeros((N, N), jnp.float32).at[edge_index[1], edge_index[0]].set(1.0)
    adj = adj.at[arange, arange].set(1.0)

    out = jax.jit(gat_l3_forward)(x, adj, params)
    out = jax.block_until_ready(out)

    ref = _forward_ref(x, adj, params)
    assert out.shape == (N, output_dim)
    # tolerance loosened vs pure-f32: approx (EUP) reciprocal in the softmax
    # normalization stacks over 3 layers.
    assert jnp.allclose(out, ref, rtol=1e-2, atol=1e-2), "mismatch vs reference"

    print("KERNEL_OK")
</pallas_src>

<mosaic_0001>
module attributes {stable_mosaic.version = 11 : i64} {
  func.func @kernel(%arg0: i32, %arg1: memref<16x8xf32, #tpu.memory_space<vmem>>, %arg2: memref<16x16xbf16, #tpu.memory_space<vmem>>, %arg3: memref<8x32xf32, #tpu.memory_space<vmem>>, %arg4: memref<32x4xf32, #tpu.memory_space<vmem>>, %arg5: memref<1x32xf32, #tpu.memory_space<vmem>>, %arg6: memref<1x32xf32, #tpu.memory_space<vmem>>, %arg7: memref<32x32xf32, #tpu.memory_space<vmem>>, %arg8: memref<32x4xf32, #tpu.memory_space<vmem>>, %arg9: memref<1x32xf32, #tpu.memory_space<vmem>>, %arg10: memref<1x32xf32, #tpu.memory_space<vmem>>, %arg11: memref<32x128xf32, #tpu.memory_space<vmem>>, %arg12: memref<128x2xf32, #tpu.memory_space<vmem>>, %arg13: memref<1x128xf32, #tpu.memory_space<vmem>>, %arg14: memref<1x128xf32, #tpu.memory_space<vmem>>, %arg15: memref<16x128xf32, #tpu.memory_space<vmem>>, %arg16: memref<16x128xf32, #tpu.memory_space<vmem>>) attributes {dimension_semantics = [#tpu.dimension_semantics<arbitrary>], iteration_bounds = array<i64: 1>, scalar_prefetch = 0 : i64, scratch_operands = 1 : i64, tpu.core_type = #tpu.core_type<tc>, window_params = [{pipeline_mode = #tpu.pipeline_mode<synchronous>, transform_indices = @transform_0, window_bounds = array<i64: 16, 8>}, {pipeline_mode = #tpu.pipeline_mode<synchronous>, transform_indices = @transform_1, window_bounds = array<i64: 16, 16>}, {pipeline_mode = #tpu.pipeline_mode<synchronous>, transform_indices = @transform_2, window_bounds = array<i64: 8, 32>}, {pipeline_mode = #tpu.pipeline_mode<synchronous>, transform_indices = @transform_3, window_bounds = array<i64: 32, 4>}, {pipeline_mode = #tpu.pipeline_mode<synchronous>, transform_indices = @transform_4, window_bounds = array<i64: 1, 32>}, {pipeline_mode = #tpu.pipeline_mode<synchronous>, transform_indices = @transform_5, window_bounds = array<i64: 1, 32>}, {pipeline_mode = #tpu.pipeline_mode<synchronous>, transform_indices = @transform_6, window_bounds = array<i64: 32, 32>}, {pipeline_mode = #tpu.pipeline_mode<synchronous>, transform_indices = @transform_7, window_bounds = array<i64: 32, 4>}, {pipeline_mode = #tpu.pipeline_mode<synchronous>, transform_indices = @transform_8, window_bounds = array<i64: 1, 32>}, {pipeline_mode = #tpu.pipeline_mode<synchronous>, transform_indices = @transform_9, window_bounds = array<i64: 1, 32>}, {pipeline_mode = #tpu.pipeline_mode<synchronous>, transform_indices = @transform_10, window_bounds = array<i64: 32, 128>}, {pipeline_mode = #tpu.pipeline_mode<synchronous>, transform_indices = @transform_11, window_bounds = array<i64: 128, 2>}, {pipeline_mode = #tpu.pipeline_mode<synchronous>, transform_indices = @transform_12, window_bounds = array<i64: 1, 128>}, {pipeline_mode = #tpu.pipeline_mode<synchronous>, transform_indices = @transform_13, window_bounds = array<i64: 1, 128>}, {pipeline_mode = #tpu.pipeline_mode<synchronous>, transform_indices = @transform_14, window_bounds = array<i64: 16, 128>}]} {
    %c0 = arith.constant 0 : index
    %c0_0 = arith.constant 0 : index
    %0 = vector.load %arg2[%c0, %c0_0] : memref<16x16xbf16, #tpu.memory_space<vmem>>, vector<16x16xbf16>
    %1 = arith.extf %0 : vector<16x16xbf16> to vector<16x16xf32>
    %c0_1 = arith.constant 0 : index
    %c0_2 = arith.constant 0 : index
    %2 = vector.load %arg1[%c0_1, %c0_2] : memref<16x8xf32, #tpu.memory_space<vmem>>, vector<16x8xf32>
    %c0_3 = arith.constant 0 : index
    %c0_4 = arith.constant 0 : index
    %3 = vector.load %arg3[%c0_3, %c0_4] : memref<8x32xf32, #tpu.memory_space<vmem>>, vector<8x32xf32>
    %cst = arith.constant dense<0.000000e+00> : vector<16x32xf32>
    %4 = tpu.matmul %2, %3, %cst {dimension_numbers = #tpu.dot_dimension_numbers<[1], [0], [0], [1], [0, 0, 1, 1], [], []>} : vector<16x8xf32>, vector<8x32xf32>, vector<16x32xf32> -> vector<16x32xf32>
    %c0_5 = arith.constant 0 : index
    %c0_6 = arith.constant 0 : index
    %5 = vector.load %arg4[%c0_5, %c0_6] : memref<32x4xf32, #tpu.memory_space<vmem>>, vector<32x4xf32>
    %cst_7 = arith.constant dense<0.000000e+00> : vector<16x4xf32>
    %6 = tpu.matmul %4, %5, %cst_7 {dimension_numbers = #tpu.dot_dimension_numbers<[1], [0], [0], [1], [0, 0, 1, 1], [], []>} : vector<16x32xf32>, vector<32x4xf32>, vector<16x4xf32> -> vector<16x4xf32>
    %7 = vector.extract_strided_slice %6 {offsets = [0, 0], sizes = [16, 1], strides = [1, 1]} : vector<16x4xf32> to vector<16x1xf32>
    %8 = vector.extract_strided_slice %6 {offsets = [0, 2], sizes = [16, 1], strides = [1, 1]} : vector<16x4xf32> to vector<16x1xf32>
    %9 = tpu.transpose %8, [1, 0] : vector<16x1xf32> -> vector<1x16xf32>
    %10 = vector.broadcast %7 : vector<16x1xf32> to vector<16x16xf32>
    %11 = vector.broadcast %9 : vector<1x16xf32> to vector<16x16xf32>
    %12 = arith.addf %10, %11 : vector<16x16xf32>
    %cst_8 = arith.constant 2.000000e-01 : f32
    %13 = vector.broadcast %cst_8 : f32 to vector<16x16xf32>
    %14 = arith.mulf %13, %12 : vector<16x16xf32>
    %15 = arith.maximumf %12, %14 : vector<16x16xf32>
    %16 = arith.addf %15, %1 : vector<16x16xf32>
    %cst_9 = arith.constant dense<0xFF800000> : vector<16xf32>
    %17 = vector.multi_reduction <maximumf>, %16, %cst_9 [1] : vector<16x16xf32> to vector<16xf32>
    %18 = vector.shape_cast %17 : vector<16xf32> to vector<16x1xf32>
    %19 = vector.broadcast %18 : vector<16x1xf32> to vector<16x16xf32>
    %20 = arith.subf %16, %19 : vector<16x16xf32>
    %21 = math.exp %20 : vector<16x16xf32>
    %cst_10 = arith.constant dense<0.000000e+00> : vector<16xf32>
    %22 = vector.multi_reduction <add>, %21, %cst_10 [1] : vector<16x16xf32> to vector<16xf32>
    %23 = vector.shape_cast %22 : vector<16xf32> to vector<16x1xf32>
    %24 = vector.extract_strided_slice %4 {offsets = [0, 0], sizes = [16, 16], strides = [1, 1]} : vector<16x32xf32> to vector<16x16xf32>
    %cst_11 = arith.constant dense<0.000000e+00> : vector<16x16xf32>
    %25 = tpu.matmul %21, %24, %cst_11 {dimension_numbers = #tpu.dot_dimension_numbers<[1], [0], [0], [1], [0, 0, 1, 1], [], []>} : vector<16x16xf32>, vector<16x16xf32>, vector<16x16xf32> -> vector<16x16xf32>
    %26 = tpu.reciprocal %23 {approx = true} : vector<16x1xf32> -> vector<16x1xf32>
    %27 = vector.broadcast %26 : vector<16x1xf32> to vector<16x16xf32>
    %28 = arith.mulf %25, %27 : vector<16x16xf32>
    %c0_12 = arith.constant 0 : index
    %c0_13 = arith.constant 0 : index
    %29 = vector.load %arg16[%c0_12, %c0_13] : memref<16x128xf32, #tpu.memory_space<vmem>>, vector<16x16xf32>
    tpu.vector_store %arg16[%c0_12, %c0_13], %28 {strides = array<i32>} : memref<16x128xf32, #tpu.memory_space<vmem>>, vector<16x16xf32>,
    %30 = vector.extract_strided_slice %6 {offsets = [0, 1], sizes = [16, 1], strides = [1, 1]} : vector<16x4xf32> to vector<16x1xf32>
    %31 = vector.extract_strided_slice %6 {offsets = [0, 3], sizes = [16, 1], strides = [1, 1]} : vector<16x4xf32> to vector<16x1xf32>
    %32 = tpu.transpose %31, [1, 0] : vector<16x1xf32> -> vector<1x16xf32>
    %33 = vector.broadcast %30 : vector<16x1xf32> to vector<16x16xf32>
    %34 = vector.broadcast %32 : vector<1x16xf32> to vector<16x16xf32>
    %35 = arith.addf %33, %34 : vector<16x16xf32>
    %cst_14 = arith.constant 2.000000e-01 : f32
    %36 = vector.broadcast %cst_14 : f32 to vector<16x16xf32>
    %37 = arith.mulf %36, %35 : vector<16x16xf32>
    %38 = arith.maximumf %35, %37 : vector<16x16xf32>
    %39 = arith.addf %38, %1 : vector<16x16xf32>
    %cst_15 = arith.constant dense<0xFF800000> : vector<16xf32>
    %40 = vector.multi_reduction <maximumf>, %39, %cst_15 [1] : vector<16x16xf32> to vector<16xf32>
    %41 = vector.shape_cast %40 : vector<16xf32> to vector<16x1xf32>
    %42 = vector.broadcast %41 : vector<16x1xf32> to vector<16x16xf32>
    %43 = arith.subf %39, %42 : vector<16x16xf32>
    %44 = math.exp %43 : vector<16x16xf32>
    %cst_16 = arith.constant dense<0.000000e+00> : vector<16xf32>
    %45 = vector.multi_reduction <add>, %44, %cst_16 [1] : vector<16x16xf32> to vector<16xf32>
    %46 = vector.shape_cast %45 : vector<16xf32> to vector<16x1xf32>
    %47 = vector.extract_strided_slice %4 {offsets = [0, 16], sizes = [16, 16], strides = [1, 1]} : vector<16x32xf32> to vector<16x16xf32>
    %cst_17 = arith.constant dense<0.000000e+00> : vector<16x16xf32>
    %48 = tpu.matmul %44, %47, %cst_17 {dimension_numbers = #tpu.dot_dimension_numbers<[1], [0], [0], [1], [0, 0, 1, 1], [], []>} : vector<16x16xf32>, vector<16x16xf32>, vector<16x16xf32> -> vector<16x16xf32>
    %49 = tpu.reciprocal %46 {approx = true} : vector<16x1xf32> -> vector<16x1xf32>
    %50 = vector.broadcast %49 : vector<16x1xf32> to vector<16x16xf32>
    %51 = arith.mulf %48, %50 : vector<16x16xf32>
    %c0_18 = arith.constant 0 : index
    %c16 = arith.constant 16 : index
    %52 = vector.load %arg16[%c0_18, %c16] : memref<16x128xf32, #tpu.memory_space<vmem>>, vector<16x16xf32>
    tpu.vector_store %arg16[%c0_18, %c16], %51 {strides = array<i32>} : memref<16x128xf32, #tpu.memory_space<vmem>>, vector<16x16xf32>,
    %c0_19 = arith.constant 0 : index
    %c0_20 = arith.constant 0 : index
    %53 = vector.load %arg16[%c0_19, %c0_20] : memref<16x128xf32, #tpu.memory_space<vmem>>, vector<16x32xf32>
    %c0_21 = arith.constant 0 : index
    %c0_22 = arith.constant 0 : index
    %54 = vector.load %arg5[%c0_21, %c0_22] : memref<1x32xf32, #tpu.memory_space<vmem>>, vector<1x32xf32>
    %55 = vector.broadcast %54 : vector<1x32xf32> to vector<16x32xf32>
    %56 = arith.mulf %53, %55 : vector<16x32xf32>
    %c0_23 = arith.constant 0 : index
    %c0_24 = arith.constant 0 : index
    %57 = vector.load %arg6[%c0_23, %c0_24] : memref<1x32xf32, #tpu.memory_space<vmem>>, vector<1x32xf32>
    %58 = vector.broadcast %57 : vector<1x32xf32> to vector<16x32xf32>
    %59 = arith.addf %56, %58 : vector<16x32xf32>
    %cst_25 = arith.constant 0.000000e+00 : f32
    %60 = vector.broadcast %cst_25 : f32 to vector<16x32xf32>
    %61 = arith.maximumf %59, %60 : vector<16x32xf32>
    %c0_26 = arith.constant 0 : index
    %c0_27 = arith.constant 0 : index
    %62 = vector.load %arg7[%c0_26, %c0_27] : memref<32x32xf32, #tpu.memory_space<vmem>>, vector<32x32xf32>
    %cst_28 = arith.constant dense<0.000000e+00> : vector<16x32xf32>
    %63 = tpu.matmul %61, %62, %cst_28 {dimension_numbers = #tpu.dot_dimension_numbers<[1], [0], [0], [1], [0, 0, 1, 1], [], []>} : vector<16x32xf32>, vector<32x32xf32>, vector<16x32xf32> -> vector<16x32xf32>
    %c0_29 = arith.constant 0 : index
    %c0_30 = arith.constant 0 : index
    %64 = vector.load %arg8[%c0_29, %c0_30] : memref<32x4xf32, #tpu.memory_space<vmem>>, vector<32x4xf32>
    %cst_31 = arith.constant dense<0.000000e+00> : vector<16x4xf32>
    %65 = tpu.matmul %63, %64, %cst_31 {dimension_numbers = #tpu.dot_dimension_numbers<[1], [0], [0], [1], [0, 0, 1, 1], [], []>} : vector<16x32xf32>, vector<32x4xf32>, vector<16x4xf32> -> vector<16x4xf32>
    %66 = vector.extract_strided_slice %65 {offsets = [0, 0], sizes = [16, 1], strides = [1, 1]} : vector<16x4xf32> to vector<16x1xf32>
    %67 = vector.extract_strided_slice %65 {offsets = [0, 2], sizes = [16, 1], strides = [1, 1]} : vector<16x4xf32> to vector<16x1xf32>
    %68 = tpu.transpose %67, [1, 0] : vector<16x1xf32> -> vector<1x16xf32>
    %69 = vector.broadcast %66 : vector<16x1xf32> to vector<16x16xf32>
    %70 = vector.broadcast %68 : vector<1x16xf32> to vector<16x16xf32>
    %71 = arith.addf %69, %70 : vector<16x16xf32>
    %cst_32 = arith.constant 2.000000e-01 : f32
    %72 = vector.broadcast %cst_32 : f32 to vector<16x16xf32>
    %73 = arith.mulf %72, %71 : vector<16x16xf32>
    %74 = arith.maximumf %71, %73 : vector<16x16xf32>
    %75 = arith.addf %74, %1 : vector<16x16xf32>
    %cst_33 = arith.constant dense<0xFF800000> : vector<16xf32>
    %76 = vector.multi_reduction <maximumf>, %75, %cst_33 [1] : vector<16x16xf32> to vector<16xf32>
    %77 = vector.shape_cast %76 : vector<16xf32> to vector<16x1xf32>
    %78 = vector.broadcast %77 : vector<16x1xf32> to vector<16x16xf32>
    %79 = arith.subf %75, %78 : vector<16x16xf32>
    %80 = math.exp %79 : vector<16x16xf32>
    %cst_34 = arith.constant dense<0.000000e+00> : vector<16xf32>
    %81 = vector.multi_reduction <add>, %80, %cst_34 [1] : vector<16x16xf32> to vector<16xf32>
    %82 = vector.shape_cast %81 : vector<16xf32> to vector<16x1xf32>
    %83 = vector.extract_strided_slice %63 {offsets = [0, 0], sizes = [16, 16], strides = [1, 1]} : vector<16x32xf32> to vector<16x16xf32>
    %cst_35 = arith.constant dense<0.000000e+00> : vector<16x16xf32>
    %84 = tpu.matmul %80, %83, %cst_35 {dimension_numbers = #tpu.dot_dimension_numbers<[1], [0], [0], [1], [0, 0, 1, 1], [], []>} : vector<16x16xf32>, vector<16x16xf32>, vector<16x16xf32> -> vector<16x16xf32>
    %85 = tpu.reciprocal %82 {approx = true} : vector<16x1xf32> -> vector<16x1xf32>
    %86 = vector.broadcast %85 : vector<16x1xf32> to vector<16x16xf32>
    %87 = arith.mulf %84, %86 : vector<16x16xf32>
    %c0_36 = arith.constant 0 : index
    %c0_37 = arith.constant 0 : index
    %88 = vector.load %arg16[%c0_36, %c0_37] : memref<16x128xf32, #tpu.memory_space<vmem>>, vector<16x16xf32>
    tpu.vector_store %arg16[%c0_36, %c0_37], %87 {strides = array<i32>} : memref<16x128xf32, #tpu.memory_space<vmem>>, vector<16x16xf32>,
    %89 = vector.extract_strided_slice %65 {offsets = [0, 1], sizes = [16, 1], strides = [1, 1]} : vector<16x4xf32> to vector<16x1xf32>
    %90 = vector.extract_strided_slice %65 {offsets = [0, 3], sizes = [16, 1], strides = [1, 1]} : vector<16x4xf32> to vector<16x1xf32>
    %91 = tpu.transpose %90, [1, 0] : vector<16x1xf32> -> vector<1x16xf32>
    %92 = vector.broadcast %89 : vector<16x1xf32> to vector<16x16xf32>
    %93 = vector.broadcast %91 : vector<1x16xf32> to vector<16x16xf32>
    %94 = arith.addf %92, %93 : vector<16x16xf32>
    %cst_38 = arith.constant 2.000000e-01 : f32
    %95 = vector.broadcast %cst_38 : f32 to vector<16x16xf32>
    %96 = arith.mulf %95, %94 : vector<16x16xf32>
    %97 = arith.maximumf %94, %96 : vector<16x16xf32>
    %98 = arith.addf %97, %1 : vector<16x16xf32>
    %cst_39 = arith.constant dense<0xFF800000> : vector<16xf32>
    %99 = vector.multi_reduction <maximumf>, %98, %cst_39 [1] : vector<16x16xf32> to vector<16xf32>
    %100 = vector.shape_cast %99 : vector<16xf32> to vector<16x1xf32>
    %101 = vector.broadcast %100 : vector<16x1xf32> to vector<16x16xf32>
    %102 = arith.subf %98, %101 : vector<16x16xf32>
    %103 = math.exp %102 : vector<16x16xf32>
    %cst_40 = arith.constant dense<0.000000e+00> : vector<16xf32>
    %104 = vector.multi_reduction <add>, %103, %cst_40 [1] : vector<16x16xf32> to vector<16xf32>
    %105 = vector.shape_cast %104 : vector<16xf32> to vector<16x1xf32>
    %106 = vector.extract_strided_slice %63 {offsets = [0, 16], sizes = [16, 16], strides = [1, 1]} : vector<16x32xf32> to vector<16x16xf32>
    %cst_41 = arith.constant dense<0.000000e+00> : vector<16x16xf32>
    %107 = tpu.matmul %103, %106, %cst_41 {dimension_numbers = #tpu.dot_dimension_numbers<[1], [0], [0], [1], [0, 0, 1, 1], [], []>} : vector<16x16xf32>, vector<16x16xf32>, vector<16x16xf32> -> vector<16x16xf32>
    %108 = tpu.reciprocal %105 {approx = true} : vector<16x1xf32> -> vector<16x1xf32>
    %109 = vector.broadcast %108 : vector<16x1xf32> to vector<16x16xf32>
    %110 = arith.mulf %107, %109 : vector<16x16xf32>
    %c0_42 = arith.constant 0 : index
    %c16_43 = arith.constant 16 : index
    %111 = vector.load %arg16[%c0_42, %c16_43] : memref<16x128xf32, #tpu.memory_space<vmem>>, vector<16x16xf32>
    tpu.vector_store %arg16[%c0_42, %c16_43], %110 {strides = array<i32>} : memref<16x128xf32, #tpu.memory_space<vmem>>, vector<16x16xf32>,
    %c0_44 = arith.constant 0 : index
    %c0_45 = arith.constant 0 : index
    %112 = vector.load %arg16[%c0_44, %c0_45] : memref<16x128xf32, #tpu.memory_space<vmem>>, vector<16x32xf32>
    %c0_46 = arith.constant 0 : index
    %c0_47 = arith.constant 0 : index
    %113 = vector.load %arg9[%c0_46, %c0_47] : memref<1x32xf32, #tpu.memory_space<vmem>>, vector<1x32xf32>
    %114 = vector.broadcast %113 : vector<1x32xf32> to vector<16x32xf32>
    %115 = arith.mulf %112, %114 : vector<16x32xf32>
    %c0_48 = arith.constant 0 : index
    %c0_49 = arith.constant 0 : index
    %116 = vector.load %arg10[%c0_48, %c0_49] : memref<1x32xf32, #tpu.memory_space<vmem>>, vector<1x32xf32>
    %117 = vector.broadcast %116 : vector<1x32xf32> to vector<16x32xf32>
    %118 = arith.addf %115, %117 : vector<16x32xf32>
    %cst_50 = arith.constant 0.000000e+00 : f32
    %119 = vector.broadcast %cst_50 : f32 to vector<16x32xf32>
    %120 = arith.maximumf %118, %119 : vector<16x32xf32>
    %c0_51 = arith.constant 0 : index
    %c0_52 = arith.constant 0 : index
    %121 = vector.load %arg11[%c0_51, %c0_52] : memref<32x128xf32, #tpu.memory_space<vmem>>, vector<32x128xf32>
    %cst_53 = arith.constant dense<0.000000e+00> : vector<16x128xf32>
    %122 = tpu.matmul %120, %121, %cst_53 {dimension_numbers = #tpu.dot_dimension_numbers<[1], [0], [0], [1], [0, 0, 1, 1], [], []>} : vector<16x32xf32>, vector<32x128xf32>, vector<16x128xf32> -> vector<16x128xf32>
    %c0_54 = arith.constant 0 : index
    %c0_55 = arith.constant 0 : index
    %123 = vector.load %arg12[%c0_54, %c0_55] : memref<128x2xf32, #tpu.memory_space<vmem>>, vector<128x2xf32>
    %cst_56 = arith.constant dense<0.000000e+00> : vector<16x2xf32>
    %124 = tpu.matmul %122, %123, %cst_56 {dimension_numbers = #tpu.dot_dimension_numbers<[1], [0], [0], [1], [0, 0, 1, 1], [], []>} : vector<16x128xf32>, vector<128x2xf32>, vector<16x2xf32> -> vector<16x2xf32>
    %125 = vector.extract_strided_slice %124 {offsets = [0, 0], sizes = [16, 1], strides = [1, 1]} : vector<16x2xf32> to vector<16x1xf32>
    %126 = vector.extract_strided_slice %124 {offsets = [0, 1], sizes = [16, 1], strides = [1, 1]} : vector<16x2xf32> to vector<16x1xf32>
    %127 = tpu.transpose %126, [1, 0] : vector<16x1xf32> -> vector<1x16xf32>
    %128 = vector.broadcast %125 : vector<16x1xf32> to vector<16x16xf32>
    %129 = vector.broadcast %127 : vector<1x16xf32> to vector<16x16xf32>
    %130 = arith.addf %128, %129 : vector<16x16xf32>
    %cst_57 = arith.constant 2.000000e-01 : f32
    %131 = vector.broadcast %cst_57 : f32 to vector<16x16xf32>
    %132 = arith.mulf %131, %130 : vector<16x16xf32>
    %133 = arith.maximumf %130, %132 : vector<16x16xf32>
    %134 = arith.addf %133, %1 : vector<16x16xf32>
    %cst_58 = arith.constant dense<0xFF800000> : vector<16xf32>
    %135 = vector.multi_reduction <maximumf>, %134, %cst_58 [1] : vector<16x16xf32> to vector<16xf32>
    %136 = vector.shape_cast %135 : vector<16xf32> to vector<16x1xf32>
    %137 = vector.broadcast %136 : vector<16x1xf32> to vector<16x16xf32>
    %138 = arith.subf %134, %137 : vector<16x16xf32>
    %139 = math.exp %138 : vector<16x16xf32>
    %cst_59 = arith.constant dense<0.000000e+00> : vector<16xf32>
    %140 = vector.multi_reduction <add>, %139, %cst_59 [1] : vector<16x16xf32> to vector<16xf32>
    %141 = vector.shape_cast %140 : vector<16xf32> to vector<16x1xf32>
    %cst_60 = arith.constant dense<0.000000e+00> : vector<16x128xf32>
    %142 = tpu.matmul %139, %122, %cst_60 {dimension_numbers = #tpu.dot_dimension_numbers<[1], [0], [0], [1], [0, 0, 1, 1], [], []>} : vector<16x16xf32>, vector<16x128xf32>, vector<16x128xf32> -> vector<16x128xf32>
    %143 = tpu.reciprocal %141 {approx = true} : vector<16x1xf32> -> vector<16x1xf32>
    %144 = vector.broadcast %143 : vector<16x1xf32> to vector<16x128xf32>
    %145 = arith.mulf %142, %144 : vector<16x128xf32>
    %c0_61 = arith.constant 0 : index
    %c0_62 = arith.constant 0 : index
    %146 = vector.load %arg16[%c0_61, %c0_62] : memref<16x128xf32, #tpu.memory_space<vmem>>, vector<16x128xf32>
    tpu.vector_store %arg16[%c0_61, %c0_62], %145 {strides = array<i32>} : memref<16x128xf32, #tpu.memory_space<vmem>>, vector<16x128xf32>,
    %c0_63 = arith.constant 0 : index
    %c0_64 = arith.constant 0 : index
    %147 = vector.load %arg16[%c0_63, %c0_64] : memref<16x128xf32, #tpu.memory_space<vmem>>, vector<16x128xf32>
    %c0_65 = arith.constant 0 : index
    %c0_66 = arith.constant 0 : index
    %148 = vector.load %arg13[%c0_65, %c0_66] : memref<1x128xf32, #tpu.memory_space<vmem>>, vector<1x128xf32>
    %149 = vector.broadcast %148 : vector<1x128xf32> to vector<16x128xf32>
    %150 = arith.mulf %147, %149 : vector<16x128xf32>
    %c0_67 = arith.constant 0 : index
    %c0_68 = arith.constant 0 : index
    %151 = vector.load %arg14[%c0_67, %c0_68] : memref<1x128xf32, #tpu.memory_space<vmem>>, vector<1x128xf32>
    %152 = vector.broadcast %151 : vector<1x128xf32> to vector<16x128xf32>
    %153 = arith.addf %150, %152 : vector<16x128xf32>
    %cst_69 = arith.constant 0.000000e+00 : f32
    %154 = vector.broadcast %cst_69 : f32 to vector<16x128xf32>
    %155 = arith.maximumf %153, %154 : vector<16x128xf32>
    %c0_70 = arith.constant 0 : index
    %c0_71 = arith.constant 0 : index
    %156 = vector.load %arg15[%c0_70, %c0_71] : memref<16x128xf32, #tpu.memory_space<vmem>>, vector<16x128xf32>
    tpu.vector_store %arg15[%c0_70, %c0_71], %155 {strides = array<i32>} : memref<16x128xf32, #tpu.memory_space<vmem>>, vector<16x128xf32>,
    return
  }
  func.func @transform_0(%arg0: i32) -> (i32, i32) {
    %c0_i32 = arith.constant 0 : i32
    %c0_i32_0 = arith.constant 0 : i32
    %c0_i32_1 = arith.constant 0 : i32
    return %c0_i32, %c0_i32_0 : i32, i32
  }
  func.func @transform_1(%arg0: i32) -> (i32, i32) {
    %c0_i32 = arith.constant 0 : i32
    %c0_i32_0 = arith.constant 0 : i32
    %c0_i32_1 = arith.constant 0 : i32
    return %c0_i32, %c0_i32_0 : i32, i32
  }
  func.func @transform_2(%arg0: i32) -> (i32, i32) {
    %c0_i32 = arith.constant 0 : i32
    %c0_i32_0 = arith.constant 0 : i32
    %c0_i32_1 = arith.constant 0 : i32
    return %c0_i32, %c0_i32_0 : i32, i32
  }
  func.func @transform_3(%arg0: i32) -> (i32, i32) {
    %c0_i32 = arith.constant 0 : i32
    %c0_i32_0 = arith.constant 0 : i32
    %c0_i32_1 = arith.constant 0 : i32
    return %c0_i32, %c0_i32_0 : i32, i32
  }
  func.func @transform_4(%arg0: i32) -> (i32, i32) {
    %c0_i32 = arith.constant 0 : i32
    %c0_i32_0 = arith.constant 0 : i32
    %c0_i32_1 = arith.constant 0 : i32
    return %c0_i32, %c0_i32_0 : i32, i32
  }
  func.func @transform_5(%arg0: i32) -> (i32, i32) {
    %c0_i32 = arith.constant 0 : i32
    %c0_i32_0 = arith.constant 0 : i32
    %c0_i32_1 = arith.constant 0 : i32
    return %c0_i32, %c0_i32_0 : i32, i32
  }
  func.func @transform_6(%arg0: i32) -> (i32, i32) {
    %c0_i32 = arith.constant 0 : i32
    %c0_i32_0 = arith.constant 0 : i32
    %c0_i32_1 = arith.constant 0 : i32
    return %c0_i32, %c0_i32_0 : i32, i32
  }
  func.func @transform_7(%arg0: i32) -> (i32, i32) {
    %c0_i32 = arith.constant 0 : i32
    %c0_i32_0 = arith.constant 0 : i32
    %c0_i32_1 = arith.constant 0 : i32
    return %c0_i32, %c0_i32_0 : i32, i32
  }
  func.func @transform_8(%arg0: i32) -> (i32, i32) {
    %c0_i32 = arith.constant 0 : i32
    %c0_i32_0 = arith.constant 0 : i32
    %c0_i32_1 = arith.constant 0 : i32
    return %c0_i32, %c0_i32_0 : i32, i32
  }
  func.func @transform_9(%arg0: i32) -> (i32, i32) {
    %c0_i32 = arith.constant 0 : i32
    %c0_i32_0 = arith.constant 0 : i32
    %c0_i32_1 = arith.constant 0 : i32
    return %c0_i32, %c0_i32_0 : i32, i32
  }
  func.func @transform_10(%arg0: i32) -> (i32, i32) {
    %c0_i32 = arith.constant 0 : i32
    %c0_i32_0 = arith.constant 0 : i32
    %c0_i32_1 = arith.constant 0 : i32
    return %c0_i32, %c0_i32_0 : i32, i32
  }
  func.func @transform_11(%arg0: i32) -> (i32, i32) {
    %c0_i32 = arith.constant 0 : i32
    %c0_i32_0 = arith.constant 0 : i32
    %c0_i32_1 = arith.constant 0 : i32
    return %c0_i32, %c0_i32_0 : i32, i32
  }
  func.func @transform_12(%arg0: i32) -> (i32, i32) {
    %c0_i32 = arith.constant 0 : i32
    %c0_i32_0 = arith.constant 0 : i32
    %c0_i32_1 = arith.constant 0 : i32
    return %c0_i32, %c0_i32_0 : i32, i32
  }
  func.func @transform_13(%arg0: i32) -> (i32, i32) {
    %c0_i32 = arith.constant 0 : i32
    %c0_i32_0 = arith.constant 0 : i32
    %c0_i32_1 = arith.constant 0 : i32
    return %c0_i32, %c0_i32_0 : i32, i32
  }
  func.func @transform_14(%arg0: i32) -> (i32, i32) {
    %c0_i32 = arith.constant 0 : i32
    %c0_i32_0 = arith.constant 0 : i32
    %c0_i32_1 = arith.constant 0 : i32
    return %c0_i32, %c0_i32_0 : i32, i32
  }
}

</mosaic_0001>

<llo_original>
// kernel: gat_l3_forward.1
$region0: #{gat_l3_forward.1}
  #allocation0 [shape = 'u32[]', space=smem, size = 0x4, offset = 0x4, fixed_abs, tag = 'smem constant byte address 0x4 - core index']
  #allocation1 [shape = 'u32[144,128]{1,0:T(1,128)}', space=vmem, size = 0x12000, scoped, tag = 'internal scratch']
  #allocation2 [shape = 'f32[16,128]{1,0:T(8,128)}', space=vmem, size = 0x2000, scoped, tag = 'scratch operand']
  %s0 = inlined_call_operand.vmem [shape: f32[16,8], index: 0, kind: input, shape index: {}]
  %s1 = inlined_call_operand.vmem [shape: bf16[16,16], index: 1, kind: input, shape index: {}]
  %s2 = inlined_call_operand.vmem [shape: f32[8,32], index: 2, kind: input, shape index: {}]
  %s3 = inlined_call_operand.vmem [shape: f32[32,4], index: 3, kind: input, shape index: {}]
  %s4 = inlined_call_operand.vmem [shape: f32[1,32], index: 4, kind: input, shape index: {}]
  %s5 = inlined_call_operand.vmem [shape: f32[1,32], index: 5, kind: input, shape index: {}]
  %s6 = inlined_call_operand.vmem [shape: f32[32,32], index: 6, kind: input, shape index: {}]
  %s7 = inlined_call_operand.vmem [shape: f32[32,4], index: 7, kind: input, shape index: {}]
  %s8 = inlined_call_operand.vmem [shape: f32[1,32], index: 8, kind: input, shape index: {}]
  %s9 = inlined_call_operand.vmem [shape: f32[1,32], index: 9, kind: input, shape index: {}]
  %s10 = inlined_call_operand.vmem [shape: f32[32,128], index: 10, kind: input, shape index: {}]
  %s11 = inlined_call_operand.vmem [shape: f32[128,2], index: 11, kind: input, shape index: {}]
  %s12 = inlined_call_operand.vmem [shape: f32[1,128], index: 12, kind: input, shape index: {}]
  %s13 = inlined_call_operand.vmem [shape: f32[1,128], index: 13, kind: input, shape index: {}]
  %s14 = inlined_call_operand.vmem [shape: f32[16,128], index: 14, kind: output, shape index: {}]
  %s15 = sld [smem:[#allocation0]]
  $region66: #{gat_l3_forward.1} parent=0
    _
  %s17 = ssub.s32 1, %s15
  %s18 = scalar_select 0, %s17, %s15
  // Predicated region
  $region2: #{gat_l3_forward.1} parent=0 // pred_check
    _
  $region3: #{gat_l3_forward.1} parent=0 // pred_check_branch
    %20 = sbr.rel (0) target = $region5
  $region4: #{gat_l3_forward.1} parent=0 // pred_region
    _
  $region5: #{gat_l3_forward.1} parent=0 // pred_fallthru
    _
  // Predicated region
  $region6: #{gat_l3_forward.1} parent=0 // pred_check
    _
  $region7: #{gat_l3_forward.1} parent=0 // pred_check_branch
    %22 = sbr.rel (0) target = $region9
  $region8: #{gat_l3_forward.1} parent=0 // pred_region
    _
  $region9: #{gat_l3_forward.1} parent=0 // pred_fallthru
    _
  // Predicated region
  $region10: #{gat_l3_forward.1} parent=0 // pred_check
    _
  $region11: #{gat_l3_forward.1} parent=0 // pred_check_branch
    %24 = sbr.rel (0) target = $region13
  $region12: #{gat_l3_forward.1} parent=0 // pred_region
    _
  $region13: #{gat_l3_forward.1} parent=0 // pred_fallthru
    _
  // Predicated region
  $region14: #{gat_l3_forward.1} parent=0 // pred_check
    _
  $region15: #{gat_l3_forward.1} parent=0 // pred_check_branch
    %26 = sbr.rel (0) target = $region17
  $region16: #{gat_l3_forward.1} parent=0 // pred_region
    _
  $region17: #{gat_l3_forward.1} parent=0 // pred_fallthru
    _
  // Predicated region
  $region18: #{gat_l3_forward.1} parent=0 // pred_check
    _
  $region19: #{gat_l3_forward.1} parent=0 // pred_check_branch
    %28 = sbr.rel (0) target = $region21
  $region20: #{gat_l3_forward.1} parent=0 // pred_region
    _
  $region21: #{gat_l3_forward.1} parent=0 // pred_fallthru
    _
  // Predicated region
  $region22: #{gat_l3_forward.1} parent=0 // pred_check
    _
  $region23: #{gat_l3_forward.1} parent=0 // pred_check_branch
    %30 = sbr.rel (0) target = $region25
  $region24: #{gat_l3_forward.1} parent=0 // pred_region
    _
  $region25: #{gat_l3_forward.1} parent=0 // pred_fallthru
    _
  // Predicated region
  $region26: #{gat_l3_forward.1} parent=0 // pred_check
    _
  $region27: #{gat_l3_forward.1} parent=0 // pred_check_branch
    %32 = sbr.rel (0) target = $region29
  $region28: #{gat_l3_forward.1} parent=0 // pred_region
    _
  $region29: #{gat_l3_forward.1} parent=0 // pred_fallthru
    _
  // Predicated region
  $region30: #{gat_l3_forward.1} parent=0 // pred_check
    _
  $region31: #{gat_l3_forward.1} parent=0 // pred_check_branch
    %34 = sbr.rel (0) target = $region33
  $region32: #{gat_l3_forward.1} parent=0 // pred_region
    _
  $region33: #{gat_l3_forward.1} parent=0 // pred_fallthru
    _
  // Predicated region
  $region34: #{gat_l3_forward.1} parent=0 // pred_check
    _
  $region35: #{gat_l3_forward.1} parent=0 // pred_check_branch
    %36 = sbr.rel (0) target = $region37
  $region36: #{gat_l3_forward.1} parent=0 // pred_region
    _
  $region37: #{gat_l3_forward.1} parent=0 // pred_fallthru
    _
  // Predicated region
  $region38: #{gat_l3_forward.1} parent=0 // pred_check
    _
  $region39: #{gat_l3_forward.1} parent=0 // pred_check_branch
    %38 = sbr.rel (0) target = $region41
  $region40: #{gat_l3_forward.1} parent=0 // pred_region
    _
  $region41: #{gat_l3_forward.1} parent=0 // pred_fallthru
    _
  // Predicated region
  $region42: #{gat_l3_forward.1} parent=0 // pred_check
    _
  $region43: #{gat_l3_forward.1} parent=0 // pred_check_branch
    %40 = sbr.rel (0) target = $region45
  $region44: #{gat_l3_forward.1} parent=0 // pred_region
    _
  $region45: #{gat_l3_forward.1} parent=0 // pred_fallthru
    _
  // Predicated region
  $region46: #{gat_l3_forward.1} parent=0 // pred_check
    _
  $region47: #{gat_l3_forward.1} parent=0 // pred_check_branch
    %42 = sbr.rel (0) target = $region49
  $region48: #{gat_l3_forward.1} parent=0 // pred_region
    _
  $region49: #{gat_l3_forward.1} parent=0 // pred_fallthru
    _
  // Predicated region
  $region50: #{gat_l3_forward.1} parent=0 // pred_check
    _
  $region51: #{gat_l3_forward.1} parent=0 // pred_check_branch
    %44 = sbr.rel (0) target = $region53
  $region52: #{gat_l3_forward.1} parent=0 // pred_region
    _
  $region53: #{gat_l3_forward.1} parent=0 // pred_fallthru
    _
  // Predicated region
  $region54: #{gat_l3_forward.1} parent=0 // pred_check
    _
  $region55: #{gat_l3_forward.1} parent=0 // pred_check_branch
    %46 = sbr.rel (0) target = $region57
  $region56: #{gat_l3_forward.1} parent=0 // pred_region
    _
  $region57: #{gat_l3_forward.1} parent=0 // pred_fallthru
    _
  %v47 = vld [vmem:[%s1] sm:$0xf]
  %v48 = vld [vmem:[%s1 + $0x4] sm:$0xf]
  %v49 = vunpack.c.l.bf16 %v47
  %v50 = vunpack.c.l.bf16 %v48
  %v51 = vld [vmem:[%s0] sm:$0xff]
  %v52 = vld [vmem:[%s0 + $0x8] sm:$0xff]
  %v53 = vld [vmem:[%s2] sm:$0xff]
  %vm54 = vcmask 64512
  %v56 = vsel %vm54, %v51, 0
  %v59 = vsel %vm54, %v52, 0
  %61 = vmatprep.subr.mxu0 0.0
  %62 = vmatpush1.msra.mxu0 %v53
  %63 = vmatprep.subr.mxu0 0.0
  %64 = vmatpush1.msra.mxu0 0.0
  %65 = vmatprep.subr.mxu0 0.0
  %66 = vmatpush1.msra.mxu0 0.0
  %67 = vmatprep.subr.mxu0 0.0
  %68 = vmatpush1.msra.mxu0 0.0
  %69 = vmatprep.subr.mxu0 0.0
  %70 = vmatpush1.msra.mxu0 0.0
  %71 = vmatprep.subr.mxu0 0.0
  %72 = vmatpush1.msra.mxu0 0.0
  %73 = vmatprep.subr.mxu0 0.0
  %74 = vmatpush1.msra.mxu0 0.0
  %75 = vmatprep.subr.mxu0 0.0
  %76 = vmatpush1.msra.mxu0 0.0
  %77 = vmatprep.subr.mxu0 0.0
  %78 = vmatpush1.msra.mxu0 0.0
  %79 = vmatprep.subr.mxu0 0.0
  %80 = vmatpush1.msra.mxu0 0.0
  %81 = vmatprep.subr.mxu0 0.0
  %82 = vmatpush1.msra.mxu0 0.0
  %83 = vmatprep.subr.mxu0 0.0
  %84 = vmatpush1.msra.mxu0 0.0
  %85 = vmatprep.subr.mxu0 0.0
  %86 = vmatpush1.msra.mxu0 0.0
  %87 = vmatprep.subr.mxu0 0.0
  %88 = vmatpush1.msra.mxu0 0.0
  %89 = vmatprep.subr.mxu0 0.0
  %90 = vmatpush1.msra.mxu0 0.0
  %91 = vmatprep.subr.mxu0 0.0
  %92 = vmatpush1.msra.mxu0 0.0
  %93 = vmatprep.subr.mxu0 0.0
  %94 = vmatpush1.msra.mxu0 0.0
  %95 = vmatprep.subr.mxu0 0.0
  %96 = vmatpush1.msra.mxu0 0.0
  %97 = vmatprep.subr.mxu0 0.0
  %98 = vmatpush1.msra.mxu0 0.0
  %99 = vmatprep.subr.mxu0 0.0
  %100 = vmatpush1.msra.mxu0 0.0
  %101 = vmatprep.subr.mxu0 0.0
  %102 = vmatpush1.msra.mxu0 0.0
  %103 = vmatprep.subr.mxu0 0.0
  %104 = vmatpush1.msra.mxu0 0.0
  %105 = vmatprep.subr.mxu0 0.0
  %106 = vmatpush1.msra.mxu0 0.0
  %107 = vmatprep.subr.mxu0 0.0
  %108 = vmatpush1.msra.mxu0 0.0
  %109 = vmatprep.subr.mxu0 0.0
  %110 = vmatpush1.msra.mxu0 0.0
  %111 = vmatprep.subr.mxu0 0.0
  %112 = vmatpush1.msra.mxu0 0.0
  %113 = vmatprep.subr.mxu0 0.0
  %114 = vmatpush1.msra.mxu0 0.0
  %115 = vmatprep.subr.mxu0 0.0
  %116 = vmatpush1.msra.mxu0 0.0
  %117 = vmatprep.subr.mxu0 0.0
  %118 = vmatpush1.msra.mxu0 0.0
  %119 = vmatprep.subr.mxu0 0.0
  %120 = vmatpush1.msra.mxu0 0.0
  %121 = vmatprep.subr.mxu0 0.0
  %122 = vmatpush1.msra.mxu0 0.0
  %123 = vmatprep.subr.mxu0 0.0
  %124 = vmatpush1.msra.mxu0 0.0
  %125 = vmatprep.mubr.f32.mxu0 0.0
  %126 = vmatmul.mubr.f32.gmra.mrb[0].mxu0 %v56
  %v127 = vpop.f32.mrb[0].mxu0
  %v128 = vadd.f32 0.0, %v127
  %v129 = vpop.f32.mrb[0].mxu0
  %130 = vmatprep.mubr.f32.mxu0 0.0
  %131 = vmatmul.mubr.f32.gmra.mrb[0].mxu0 %v59
  %v132 = vpop.f32.mrb[0].mxu0
  %v133 = vadd.f32 0.0, %v132
  %v134 = vpop.f32.mrb[0].mxu0
  %135 = vdwg.mxu0
  %v136 = vld [vmem:[%s3] sm:$0xff]
  %v137 = vld [vmem:[%s3 + $0x8] sm:$0xff]
  %v138 = vld [vmem:[%s3 + $0x10] sm:$0xff]
  %v139 = vld [vmem:[%s3 + $0x18] sm:$0xff]
  %vm140 = vcmask 261120
  %v142 = vsel %vm140, %v128, 0
  %v145 = vsel %vm140, %v133, 0
  %147 = vmatprep.subr.mxu0 0.0
  %148 = vmatpush1.msra.mxu0 %v136
  %149 = vmatprep.subr.mxu0 0.0
  %150 = vmatpush1.msra.mxu0 %v137
  %151 = vmatprep.subr.mxu0 0.0
  %152 = vmatpush1.msra.mxu0 %v138
  %153 = vmatprep.subr.mxu0 0.0
  %154 = vmatpush1.msra.mxu0 %v139
  %155 = vmatprep.subr.mxu0 0.0
  %156 = vmatpush1.msra.mxu0 0.0
  %157 = vmatprep.subr.mxu0 0.0
  %158 = vmatpush1.msra.mxu0 0.0
  %159 = vmatprep.subr.mxu0 0.0
  %160 = vmatpush1.msra.mxu0 0.0
  %161 = vmatprep.subr.mxu0 0.0
  %162 = vmatpush1.msra.mxu0 0.0
  %163 = vmatprep.subr.mxu0 0.0
  %164 = vmatpush1.msra.mxu0 0.0
  %165 = vmatprep.subr.mxu0 0.0
  %166 = vmatpush1.msra.mxu0 0.0
  %167 = vmatprep.subr.mxu0 0.0
  %168 = vmatpush1.msra.mxu0 0.0
  %169 = vmatprep.subr.mxu0 0.0
  %170 = vmatpush1.msra.mxu0 0.0
  %171 = vmatprep.subr.mxu0 0.0
  %172 = vmatpush1.msra.mxu0 0.0
  %173 = vmatprep.subr.mxu0 0.0
  %174 = vmatpush1.msra.mxu0 0.0
  %175 = vmatprep.subr.mxu0 0.0
  %176 = vmatpush1.msra.mxu0 0.0
  %177 = vmatprep.subr.mxu0 0.0
  %178 = vmatpush1.msra.mxu0 0.0
  %179 = vmatprep.subr.mxu0 0.0
  %180 = vmatpush1.msra.mxu0 0.0
  %181 = vmatprep.subr.mxu0 0.0
  %182 = vmatpush1.msra.mxu0 0.0
  %183 = vmatprep.subr.mxu0 0.0
  %184 = vmatpush1.msra.mxu0 0.0
  %185 = vmatprep.subr.mxu0 0.0
  %186 = vmatpush1.msra.mxu0 0.0
  %187 = vmatprep.subr.mxu0 0.0
  %188 = vmatpush1.msra.mxu0 0.0
  %189 = vmatprep.subr.mxu0 0.0
  %190 = vmatpush1.msra.mxu0 0.0
  %191 = vmatprep.subr.mxu0 0.0
  %192 = vmatpush1.msra.mxu0 0.0
  %193 = vmatprep.subr.mxu0 0.0
  %194 = vmatpush1.msra.mxu0 0.0
  %195 = vmatprep.subr.mxu0 0.0
  %196 = vmatpush1.msra.mxu0 0.0
  %197 = vmatprep.subr.mxu0 0.0
  %198 = vmatpush1.msra.mxu0 0.0
  %199 = vmatprep.subr.mxu0 0.0
  %200 = vmatpush1.msra.mxu0 0.0
  %201 = vmatprep.subr.mxu0 0.0
  %202 = vmatpush1.msra.mxu0 0.0
  %203 = vmatprep.subr.mxu0 0.0
  %204 = vmatpush1.msra.mxu0 0.0
  %205 = vmatprep.subr.mxu0 0.0
  %206 = vmatpush1.msra.mxu0 0.0
  %207 = vmatprep.subr.mxu0 0.0
  %208 = vmatpush1.msra.mxu0 0.0
  %209 = vmatprep.subr.mxu0 0.0
  %210 = vmatpush1.msra.mxu0 0.0
  %211 = vmatprep.mubr.f32.mxu0 0.0
  %212 = vmatmul.mubr.f32.gmra.mrb[0].mxu0 %v142
  %v213 = vpop.f32.mrb[0].mxu0
  %v214 = vadd.f32 0.0, %v213
  %v215 = vpop.f32.mrb[0].mxu0
  %216 = vmatprep.mubr.f32.mxu0 0.0
  %217 = vmatmul.mubr.f32.gmra.mrb[0].mxu0 %v145
  %v218 = vpop.f32.mrb[0].mxu0
  %v219 = vadd.f32 0.0, %v218
  %v220 = vpop.f32.mrb[0].mxu0
  %221 = vdwg.mxu0
  %224 = vrot.lane.b32.xlu0 %v214, 126
  %v225 = vpop.permute.xlu0 %224
  %226 = vrot.lane.b32.xlu0 %v219, 126
  %v227 = vpop.permute.xlu0 %226
  %230 = vxpose.xlu0.b32.start [1/16] %v225, 128
  %231 = vxpose.xlu0.b32.cont [2/16] %v227, 128
  %232 = vxpose.xlu0.b32.cont [3/16] 0.0, 128
  %233 = vxpose.xlu0.b32.cont [4/16] 0.0, 128
  %234 = vxpose.xlu0.b32.cont [5/16] 0.0, 128
  %235 = vxpose.xlu0.b32.cont [6/16] 0.0, 128
  %236 = vxpose.xlu0.b32.cont [7/16] 0.0, 128
  %237 = vxpose.xlu0.b32.cont [8/16] 0.0, 128
  %238 = vxpose.xlu0.b32.cont [9/16] 0.0, 128
  %239 = vxpose.xlu0.b32.cont [10/16] 0.0, 128
  %240 = vxpose.xlu0.b32.cont [11/16] 0.0, 128
  %241 = vxpose.xlu0.b32.cont [12/16] 0.0, 128
  %242 = vxpose.xlu0.b32.cont [13/16] 0.0, 128
  %243 = vxpose.xlu0.b32.cont [14/16] 0.0, 128
  %244 = vxpose.xlu0.b32.cont [15/16] 0.0, 128
  %245 = vxpose.xlu0.b32.end [16/16] 0.0, 128
  %v246 = vpop.trf.xlu0
  %v247 = vpop.trf.xlu0
  %v248 = vpop.trf.xlu0
  %v249 = vpop.trf.xlu0
  %v250 = vpop.trf.xlu0
  %v251 = vpop.trf.xlu0
  %v252 = vpop.trf.xlu0
  %v253 = vpop.trf.xlu0
  %v254 = vpop.trf.xlu0
  %v255 = vpop.trf.xlu0
  %v256 = vpop.trf.xlu0
  %v257 = vpop.trf.xlu0
  %v258 = vpop.trf.xlu0
  %v259 = vpop.trf.xlu0
  %v260 = vpop.trf.xlu0
  %v261 = vpop.trf.xlu0
  %262 = vset.pattern.permute.xlu0 0
  %263 = vperm.xlu0 %262, %v214
  %v264 = vpop.permute.xlu0 %263
  %266 = vset.pattern.permute.xlu0 0
  %267 = vperm.xlu0 %266, %v219
  %v268 = vpop.permute.xlu0 %267
  %v270 = vlaneseq
  %v271 = vshrl.u32 %v270, 7
  %v272 = vsub.s32 0, %v271
  %v273 = vrot.slane %v246, %v272
  %v274 = vadd.f32 %v264, %v273
  %v275 = vadd.f32 %v268, %v273
  %v276 = vmul.f32 %v274, 0.2
  %v277 = vmul.f32 %v275, 0.2
  %v278 = vmax.f32 %v274, %v276
  %v279 = vmax.f32 %v275, %v277
  %v280 = vadd.f32 %v278, %v49
  %v281 = vadd.f32 %v279, %v50
  %vm282 = vcmask 130048
  %v283 = vsel %vm282, %v280, -inf
  %284 = vmax.xlane.f32.xlu0 %v283
  %v285 = vpop.xlane.xlu0 %284
  %v286 = vsel %vm282, %v281, -inf
  %287 = vmax.xlane.f32.xlu0 %v286
  %v288 = vpop.xlane.xlu0 %287
  %v289 = vsub.f32 %v280, %v285
  %v290 = vsub.f32 %v281, %v288
  %v291 = vmul.f32 %v289, 1.442695
  %v292 = vpow.pop %v291
  %v293 = vmul.f32 %v290, 1.442695
  %v294 = vpow.pop %v293
  %v295 = vsel %vm282, %v292, 0.0
  %296 = vadd.xlane.f32.xlu0 %v295
  %v297 = vpop.xlane.xlu0 %296
  %v298 = vsel %vm282, %v294, 0.0
  %299 = vadd.xlane.f32.xlu0 %v298
  %v300 = vpop.xlane.xlu0 %299
  %v302 = vsel %vm282, %v292, 0
  %v305 = vsel %vm282, %v294, 0
  %307 = vmatprep.subr.mxu0 0.0
  %308 = vmatpush1.msra.mxu0 %v128
  %309 = vmatprep.subr.mxu0 0.0
  %310 = vmatpush1.msra.mxu0 %v133
  %311 = vmatprep.subr.mxu0 0.0
  %312 = vmatpush1.msra.mxu0 0.0
  %313 = vmatprep.subr.mxu0 0.0
  %314 = vmatpush1.msra.mxu0 0.0
  %315 = vmatprep.subr.mxu0 0.0
  %316 = vmatpush1.msra.mxu0 0.0
  %317 = vmatprep.subr.mxu0 0.0
  %318 = vmatpush1.msra.mxu0 0.0
  %319 = vmatprep.subr.mxu0 0.0
  %320 = vmatpush1.msra.mxu0 0.0
  %321 = vmatprep.subr.mxu0 0.0
  %322 = vmatpush1.msra.mxu0 0.0
  %323 = vmatprep.subr.mxu0 0.0
  %324 = vmatpush1.msra.mxu0 0.0
  %325 = vmatprep.subr.mxu0 0.0
  %326 = vmatpush1.msra.mxu0 0.0
  %327 = vmatprep.subr.mxu0 0.0
  %328 = vmatpush1.msra.mxu0 0.0
  %329 = vmatprep.subr.mxu0 0.0
  %330 = vmatpush1.msra.mxu0 0.0
  %331 = vmatprep.subr.mxu0 0.0
  %332 = vmatpush1.msra.mxu0 0.0
  %333 = vmatprep.subr.mxu0 0.0
  %334 = vmatpush1.msra.mxu0 0.0
  %335 = vmatprep.subr.mxu0 0.0
  %336 = vmatpush1.msra.mxu0 0.0
  %337 = vmatprep.subr.mxu0 0.0
  %338 = vmatpush1.msra.mxu0 0.0
  %339 = vmatprep.subr.mxu0 0.0
  %340 = vmatpush1.msra.mxu0 0.0
  %341 = vmatprep.subr.mxu0 0.0
  %342 = vmatpush1.msra.mxu0 0.0
  %343 = vmatprep.subr.mxu0 0.0
  %344 = vmatpush1.msra.mxu0 0.0
  %345 = vmatprep.subr.mxu0 0.0
  %346 = vmatpush1.msra.mxu0 0.0
  %347 = vmatprep.subr.mxu0 0.0
  %348 = vmatpush1.msra.mxu0 0.0
  %349 = vmatprep.subr.mxu0 0.0
  %350 = vmatpush1.msra.mxu0 0.0
  %351 = vmatprep.subr.mxu0 0.0
  %352 = vmatpush1.msra.mxu0 0.0
  %353 = vmatprep.subr.mxu0 0.0
  %354 = vmatpush1.msra.mxu0 0.0
  %355 = vmatprep.subr.mxu0 0.0
  %356 = vmatpush1.msra.mxu0 0.0
  %357 = vmatprep.subr.mxu0 0.0
  %358 = vmatpush1.msra.mxu0 0.0
  %359 = vmatprep.subr.mxu0 0.0
  %360 = vmatpush1.msra.mxu0 0.0
  %361 = vmatprep.subr.mxu0 0.0
  %362 = vmatpush1.msra.mxu0 0.0
  %363 = vmatprep.subr.mxu0 0.0
  %364 = vmatpush1.msra.mxu0 0.0
  %365 = vmatprep.subr.mxu0 0.0
  %366 = vmatpush1.msra.mxu0 0.0
  %367 = vmatprep.subr.mxu0 0.0
  %368 = vmatpush1.msra.mxu0 0.0
  %369 = vmatprep.subr.mxu0 0.0
  %370 = vmatpush1.msra.mxu0 0.0
  %371 = vmatprep.mubr.f32.mxu0 0.0
  %372 = vmatmul.mubr.f32.gmra.mrb[0].mxu0 %v302
  %v373 = vpop.f32.mrb[0].mxu0
  %v374 = vadd.f32 0.0, %v373
  %v375 = vpop.f32.mrb[0].mxu0
  %376 = vmatprep.mubr.f32.mxu0 0.0
  %377 = vmatmul.mubr.f32.gmra.mrb[0].mxu0 %v305
  %v378 = vpop.f32.mrb[0].mxu0
  %v379 = vadd.f32 0.0, %v378
  %v380 = vpop.f32.mrb[0].mxu0
  %381 = vdwg.mxu0
  %v382 = vrcp.pop %v297
  %v383 = vrcp.pop %v300
  %v384 = vmul.f32 %v374, %v382
  %v385 = vmul.f32 %v379, %v383
  %386 = vst.msk [vmem:[#allocation2] sm:$0xff] %vm282, %v384
  %387 = vst.msk [vmem:[#allocation2 + $0x8] sm:$0xff] %vm282, %v385
  %388 = vrot.lane.b32.xlu0 %v214, 125
  %v389 = vpop.permute.xlu0 %388
  %390 = vrot.lane.b32.xlu0 %v219, 125
  %v391 = vpop.permute.xlu0 %390
  %394 = vxpose.xlu0.b32.start [1/16] %v389, 128
  %395 = vxpose.xlu0.b32.cont [2/16] %v391, 128
  %396 = vxpose.xlu0.b32.cont [3/16] 0.0, 128
  %397 = vxpose.xlu0.b32.cont [4/16] 0.0, 128
  %398 = vxpose.xlu0.b32.cont [5/16] 0.0, 128
  %399 = vxpose.xlu0.b32.cont [6/16] 0.0, 128
  %400 = vxpose.xlu0.b32.cont [7/16] 0.0, 128
  %401 = vxpose.xlu0.b32.cont [8/16] 0.0, 128
  %402 = vxpose.xlu0.b32.cont [9/16] 0.0, 128
  %403 = vxpose.xlu0.b32.cont [10/16] 0.0, 128
  %404 = vxpose.xlu0.b32.cont [11/16] 0.0, 128
  %405 = vxpose.xlu0.b32.cont [12/16] 0.0, 128
  %406 = vxpose.xlu0.b32.cont [13/16] 0.0, 128
  %407 = vxpose.xlu0.b32.cont [14/16] 0.0, 128
  %408 = vxpose.xlu0.b32.cont [15/16] 0.0, 128
  %409 = vxpose.xlu0.b32.end [16/16] 0.0, 128
  %v410 = vpop.trf.xlu0
  %v411 = vpop.trf.xlu0
  %v412 = vpop.trf.xlu0
  %v413 = vpop.trf.xlu0
  %v414 = vpop.trf.xlu0
  %v415 = vpop.trf.xlu0
  %v416 = vpop.trf.xlu0
  %v417 = vpop.trf.xlu0
  %v418 = vpop.trf.xlu0
  %v419 = vpop.trf.xlu0
  %v420 = vpop.trf.xlu0
  %v421 = vpop.trf.xlu0
  %v422 = vpop.trf.xlu0
  %v423 = vpop.trf.xlu0
  %v424 = vpop.trf.xlu0
  %v425 = vpop.trf.xlu0
  %426 = vset.pattern.permute.xlu0 1
  %427 = vperm.xlu0 %426, %v214
  %v428 = vpop.permute.xlu0 %427
  %430 = vset.pattern.permute.xlu0 1
  %431 = vperm.xlu0 %430, %v219
  %v432 = vpop.permute.xlu0 %431
  %v434 = vlaneseq
  %v435 = vshrl.u32 %v434, 7
  %v436 = vsub.s32 0, %v435
  %v437 = vrot.slane %v410, %v436
  %v438 = vadd.f32 %v428, %v437
  %v439 = vadd.f32 %v432, %v437
  %v440 = vmul.f32 %v438, 0.2
  %v441 = vmul.f32 %v439, 0.2
  %v442 = vmax.f32 %v438, %v440
  %v443 = vmax.f32 %v439, %v441
  %v444 = vadd.f32 %v442, %v49
  %v445 = vadd.f32 %v443, %v50
  %v446 = vsel %vm282, %v444, -inf
  %447 = vmax.xlane.f32.xlu0 %v446
  %v448 = vpop.xlane.xlu0 %447
  %v449 = vsel %vm282, %v445, -inf
  %450 = vmax.xlane.f32.xlu0 %v449
  %v451 = vpop.xlane.xlu0 %450
  %v452 = vsub.f32 %v444, %v448
  %v453 = vsub.f32 %v445, %v451
  %v454 = vmul.f32 %v452, 1.442695
  %v455 = vpow.pop %v454
  %v456 = vmul.f32 %v453, 1.442695
  %v457 = vpow.pop %v456
  %v458 = vsel %vm282, %v455, 0.0
  %459 = vadd.xlane.f32.xlu0 %v458
  %v460 = vpop.xlane.xlu0 %459
  %v461 = vsel %vm282, %v457, 0.0
  %462 = vadd.xlane.f32.xlu0 %v461
  %v463 = vpop.xlane.xlu0 %462
  %464 = vrot.lane.b32.xlu0 %v128, 112
  %v465 = vpop.permute.xlu0 %464
  %466 = vrot.lane.b32.xlu0 %v133, 112
  %v467 = vpop.permute.xlu0 %466
  %v471 = vsel %vm282, %v455, 0
  %v474 = vsel %vm282, %v457, 0
  %476 = vmatprep.subr.mxu0 0.0
  %477 = vmatpush1.msra.mxu0 %v465
  %478 = vmatprep.subr.mxu0 0.0
  %479 = vmatpush1.msra.mxu0 %v467
  %480 = vmatprep.subr.mxu0 0.0
  %481 = vmatpush1.msra.mxu0 0.0
  %482 = vmatprep.subr.mxu0 0.0
  %483 = vmatpush1.msra.mxu0 0.0
  %484 = vmatprep.subr.mxu0 0.0
  %485 = vmatpush1.msra.mxu0 0.0
  %486 = vmatprep.subr.mxu0 0.0
  %487 = vmatpush1.msra.mxu0 0.0
  %488 = vmatprep.subr.mxu0 0.0
  %489 = vmatpush1.msra.mxu0 0.0
  %490 = vmatprep.subr.mxu0 0.0
  %491 = vmatpush1.msra.mxu0 0.0
  %492 = vmatprep.subr.mxu0 0.0
  %493 = vmatpush1.msra.mxu0 0.0
  %494 = vmatprep.subr.mxu0 0.0
  %495 = vmatpush1.msra.mxu0 0.0
  %496 = vmatprep.subr.mxu0 0.0
  %497 = vmatpush1.msra.mxu0 0.0
  %498 = vmatprep.subr.mxu0 0.0
  %499 = vmatpush1.msra.mxu0 0.0
  %500 = vmatprep.subr.mxu0 0.0
  %501 = vmatpush1.msra.mxu0 0.0
  %502 = vmatprep.subr.mxu0 0.0
  %503 = vmatpush1.msra.mxu0 0.0
  %504 = vmatprep.subr.mxu0 0.0
  %505 = vmatpush1.msra.mxu0 0.0
  %506 = vmatprep.subr.mxu0 0.0
  %507 = vmatpush1.msra.mxu0 0.0
  %508 = vmatprep.subr.mxu0 0.0
  %509 = vmatpush1.msra.mxu0 0.0
  %510 = vmatprep.subr.mxu0 0.0
  %511 = vmatpush1.msra.mxu0 0.0
  %512 = vmatprep.subr.mxu0 0.0
  %513 = vmatpush1.msra.mxu0 0.0
  %514 = vmatprep.subr.mxu0 0.0
  %515 = vmatpush1.msra.mxu0 0.0
  %516 = vmatprep.subr.mxu0 0.0
  %517 = vmatpush1.msra.mxu0 0.0
  %518 = vmatprep.subr.mxu0 0.0
  %519 = vmatpush1.msra.mxu0 0.0
  %520 = vmatprep.subr.mxu0 0.0
  %521 = vmatpush1.msra.mxu0 0.0
  %522 = vmatprep.subr.mxu0 0.0
  %523 = vmatpush1.msra.mxu0 0.0
  %524 = vmatprep.subr.mxu0 0.0
  %525 = vmatpush1.msra.mxu0 0.0
  %526 = vmatprep.subr.mxu0 0.0
  %527 = vmatpush1.msra.mxu0 0.0
  %528 = vmatprep.subr.mxu0 0.0
  %529 = vmatpush1.msra.mxu0 0.0
  %530 = vmatprep.subr.mxu0 0.0
  %531 = vmatpush1.msra.mxu0 0.0
  %532 = vmatprep.subr.mxu0 0.0
  %533 = vmatpush1.msra.mxu0 0.0
  %534 = vmatprep.subr.mxu0 0.0
  %535 = vmatpush1.msra.mxu0 0.0
  %536 = vmatprep.subr.mxu0 0.0
  %537 = vmatpush1.msra.mxu0 0.0
  %538 = vmatprep.subr.mxu0 0.0
  %539 = vmatpush1.msra.mxu0 0.0
  %540 = vmatprep.mubr.f32.mxu0 0.0
  %541 = vmatmul.mubr.f32.gmra.mrb[0].mxu0 %v471
  %v542 = vpop.f32.mrb[0].mxu0
  %v543 = vadd.f32 0.0, %v542
  %v544 = vpop.f32.mrb[0].mxu0
  %545 = vmatprep.mubr.f32.mxu0 0.0
  %546 = vmatmul.mubr.f32.gmra.mrb[0].mxu0 %v474
  %v547 = vpop.f32.mrb[0].mxu0
  %v548 = vadd.f32 0.0, %v547
  %v549 = vpop.f32.mrb[0].mxu0
  %550 = vdwg.mxu0
  %v551 = vrcp.pop %v460
  %v552 = vrcp.pop %v463
  %v553 = vmul.f32 %v543, %v551
  %v554 = vmul.f32 %v548, %v552
  %557 = vrot.lane.b32.xlu0 %v553, 16
  %v558 = vpop.permute.xlu0 %557
  %559 = vrot.lane.b32.xlu0 %v554, 16
  %v560 = vpop.permute.xlu0 %559
  %vm563 = vcmask 261248
  %564 = vst.msk [vmem:[#allocation2] sm:$0xff] %vm563, %v558
  %565 = vst.msk [vmem:[#allocation2 + $0x8] sm:$0xff] %vm563, %v560
  %v566 = vld [vmem:[#allocation2] sm:$0xff]
  %v567 = vld [vmem:[#allocation2 + $0x8] sm:$0xff]
  %v568 = vld [vmem:[%s4] sm:$0x1]
  %v570 = vlaneseq
  %v571 = vshrl.u32 %v570, 7
  %v572 = vsub.s32 0, %v571
  %v573 = vrot.slane %v568, %v572
  %v575 = vmul.f32 %v566, %v573
  %v576 = vmul.f32 %v567, %v573
  %v577 = vld [vmem:[%s5] sm:$0x1]
  %v579 = vlaneseq
  %v580 = vshrl.u32 %v579, 7
  %v581 = vsub.s32 0, %v580
  %v582 = vrot.slane %v577, %v581
  %v584 = vadd.f32 %v575, %v582
  %v585 = vadd.f32 %v576, %v582
  %v586 = vmax.f32 %v584, 0.0
  %v587 = vmax.f32 %v585, 0.0
  %v588 = vld [vmem:[%s6] sm:$0xff]
  %v589 = vld [vmem:[%s6 + $0x8] sm:$0xff]
  %v590 = vld [vmem:[%s6 + $0x10] sm:$0xff]
  %v591 = vld [vmem:[%s6 + $0x18] sm:$0xff]
  %v593 = vsel %vm140, %v586, 0
  %v596 = vsel %vm140, %v587, 0
  %598 = vmatprep.subr.mxu0 0.0
  %599 = vmatpush1.msra.mxu0 %v588
  %600 = vmatprep.subr.mxu0 0.0
  %601 = vmatpush1.msra.mxu0 %v589
  %602 = vmatprep.subr.mxu0 0.0
  %603 = vmatpush1.msra.mxu0 %v590
  %604 = vmatprep.subr.mxu0 0.0
  %605 = vmatpush1.msra.mxu0 %v591
  %606 = vmatprep.subr.mxu0 0.0
  %607 = vmatpush1.msra.mxu0 0.0
  %608 = vmatprep.subr.mxu0 0.0
  %609 = vmatpush1.msra.mxu0 0.0
  %610 = vmatprep.subr.mxu0 0.0
  %611 = vmatpush1.msra.mxu0 0.0
  %612 = vmatprep.subr.mxu0 0.0
  %613 = vmatpush1.msra.mxu0 0.0
  %614 = vmatprep.subr.mxu0 0.0
  %615 = vmatpush1.msra.mxu0 0.0
  %616 = vmatprep.subr.mxu0 0.0
  %617 = vmatpush1.msra.mxu0 0.0
  %618 = vmatprep.subr.mxu0 0.0
  %619 = vmatpush1.msra.mxu0 0.0
  %620 = vmatprep.subr.mxu0 0.0
  %621 = vmatpush1.msra.mxu0 0.0
  %622 = vmatprep.subr.mxu0 0.0
  %623 = vmatpush1.msra.mxu0 0.0
  %624 = vmatprep.subr.mxu0 0.0
  %625 = vmatpush1.msra.mxu0 0.0
  %626 = vmatprep.subr.mxu0 0.0
  %627 = vmatpush1.msra.mxu0 0.0
  %628 = vmatprep.subr.mxu0 0.0
  %629 = vmatpush1.msra.mxu0 0.0
  %630 = vmatprep.subr.mxu0 0.0
  %631 = vmatpush1.msra.mxu0 0.0
  %632 = vmatprep.subr.mxu0 0.0
  %633 = vmatpush1.msra.mxu0 0.0
  %634 = vmatprep.subr.mxu0 0.0
  %635 = vmatpush1.msra.mxu0 0.0
  %636 = vmatprep.subr.mxu0 0.0
  %637 = vmatpush1.msra.mxu0 0.0
  %638 = vmatprep.subr.mxu0 0.0
  %639 = vmatpush1.msra.mxu0 0.0
  %640 = vmatprep.subr.mxu0 0.0
  %641 = vmatpush1.msra.mxu0 0.0
  %642 = vmatprep.subr.mxu0 0.0
  %643 = vmatpush1.msra.mxu0 0.0
  %644 = vmatprep.subr.mxu0 0.0
  %645 = vmatpush1.msra.mxu0 0.0
  %646 = vmatprep.subr.mxu0 0.0
  %647 = vmatpush1.msra.mxu0 0.0
  %648 = vmatprep.subr.mxu0 0.0
  %649 = vmatpush1.msra.mxu0 0.0
  %650 = vmatprep.subr.mxu0 0.0
  %651 = vmatpush1.msra.mxu0 0.0
  %652 = vmatprep.subr.mxu0 0.0
  %653 = vmatpush1.msra.mxu0 0.0
  %654 = vmatprep.subr.mxu0 0.0
  %655 = vmatpush1.msra.mxu0 0.0
  %656 = vmatprep.subr.mxu0 0.0
  %657 = vmatpush1.msra.mxu0 0.0
  %658 = vmatprep.subr.mxu0 0.0
  %659 = vmatpush1.msra.mxu0 0.0
  %660 = vmatprep.subr.mxu0 0.0
  %661 = vmatpush1.msra.mxu0 0.0
  %662 = vmatprep.mubr.f32.mxu0 0.0
  %663 = vmatmul.mubr.f32.gmra.mrb[0].mxu0 %v593
  %v664 = vpop.f32.mrb[0].mxu0
  %v665 = vadd.f32 0.0, %v664
  %v666 = vpop.f32.mrb[0].mxu0
  %667 = vmatprep.mubr.f32.mxu0 0.0
  %668 = vmatmul.mubr.f32.gmra.mrb[0].mxu0 %v596
  %v669 = vpop.f32.mrb[0].mxu0
  %v670 = vadd.f32 0.0, %v669
  %v671 = vpop.f32.mrb[0].mxu0
  %672 = vdwg.mxu0
  %v673 = vld [vmem:[%s7] sm:$0xff]
  %v674 = vld [vmem:[%s7 + $0x8] sm:$0xff]
  %v675 = vld [vmem:[%s7 + $0x10] sm:$0xff]
  %v676 = vld [vmem:[%s7 + $0x18] sm:$0xff]
  %v678 = vsel %vm140, %v665, 0
  %v681 = vsel %vm140, %v670, 0
  %683 = vmatprep.subr.mxu0 0.0
  %684 = vmatpush1.msra.mxu0 %v673
  %685 = vmatprep.subr.mxu0 0.0
  %686 = vmatpush1.msra.mxu0 %v674
  %687 = vmatprep.subr.mxu0 0.0
  %688 = vmatpush1.msra.mxu0 %v675
  %689 = vmatprep.subr.mxu0 0.0
  %690 = vmatpush1.msra.mxu0 %v676
  %691 = vmatprep.subr.mxu0 0.0
  %692 = vmatpush1.msra.mxu0 0.0
  %693 = vmatprep.subr.mxu0 0.0
  %694 = vmatpush1.msra.mxu0 0.0
  %695 = vmatprep.subr.mxu0 0.0
  %696 = vmatpush1.msra.mxu0 0.0
  %697 = vmatprep.subr.mxu0 0.0
  %698 = vmatpush1.msra.mxu0 0.0
  %699 = vmatprep.subr.mxu0 0.0
  %700 = vmatpush1.msra.mxu0 0.0
  %701 = vmatprep.subr.mxu0 0.0
  %702 = vmatpush1.msra.mxu0 0.0
  %703 = vmatprep.subr.mxu0 0.0
  %704 = vmatpush1.msra.mxu0 0.0
  %705 = vmatprep.subr.mxu0 0.0
  %706 = vmatpush1.msra.mxu0 0.0
  %707 = vmatprep.subr.mxu0 0.0
  %708 = vmatpush1.msra.mxu0 0.0
  %709 = vmatprep.subr.mxu0 0.0
  %710 = vmatpush1.msra.mxu0 0.0
  %711 = vmatprep.subr.mxu0 0.0
  %712 = vmatpush1.msra.mxu0 0.0
  %713 = vmatprep.subr.mxu0 0.0
  %714 = vmatpush1.msra.mxu0 0.0
  %715 = vmatprep.subr.mxu0 0.0
  %716 = vmatpush1.msra.mxu0 0.0
  %717 = vmatprep.subr.mxu0 0.0
  %718 = vmatpush1.msra.mxu0 0.0
  %719 = vmatprep.subr.mxu0 0.0
  %720 = vmatpush1.msra.mxu0 0.0
  %721 = vmatprep.subr.mxu0 0.0
  %722 = vmatpush1.msra.mxu0 0.0
  %723 = vmatprep.subr.mxu0 0.0
  %724 = vmatpush1.msra.mxu0 0.0
  %725 = vmatprep.subr.mxu0 0.0
  %726 = vmatpush1.msra.mxu0 0.0
  %727 = vmatprep.subr.mxu0 0.0
  %728 = vmatpush1.msra.mxu0 0.0
  %729 = vmatprep.subr.mxu0 0.0
  %730 = vmatpush1.msra.mxu0 0.0
  %731 = vmatprep.subr.mxu0 0.0
  %732 = vmatpush1.msra.mxu0 0.0
  %733 = vmatprep.subr.mxu0 0.0
  %734 = vmatpush1.msra.mxu0 0.0
  %735 = vmatprep.subr.mxu0 0.0
  %736 = vmatpush1.msra.mxu0 0.0
  %737 = vmatprep.subr.mxu0 0.0
  %738 = vmatpush1.msra.mxu0 0.0
  %739 = vmatprep.subr.mxu0 0.0
  %740 = vmatpush1.msra.mxu0 0.0
  %741 = vmatprep.subr.mxu0 0.0
  %742 = vmatpush1.msra.mxu0 0.0
  %743 = vmatprep.subr.mxu0 0.0
  %744 = vmatpush1.msra.mxu0 0.0
  %745 = vmatprep.subr.mxu0 0.0
  %746 = vmatpush1.msra.mxu0 0.0
  %747 = vmatprep.mubr.f32.mxu0 0.0
  %748 = vmatmul.mubr.f32.gmra.mrb[0].mxu0 %v678
  %v749 = vpop.f32.mrb[0].mxu0
  %v750 = vadd.f32 0.0, %v749
  %v751 = vpop.f32.mrb[0].mxu0
  %752 = vmatprep.mubr.f32.mxu0 0.0
  %753 = vmatmul.mubr.f32.gmra.mrb[0].mxu0 %v681
  %v754 = vpop.f32.mrb[0].mxu0
  %v755 = vadd.f32 0.0, %v754
  %v756 = vpop.f32.mrb[0].mxu0
  %757 = vdwg.mxu0
  %760 = vrot.lane.b32.xlu0 %v750, 126
  %v761 = vpop.permute.xlu0 %760
  %762 = vrot.lane.b32.xlu0 %v755, 126
  %v763 = vpop.permute.xlu0 %762
  %766 = vxpose.xlu0.b32.start [1/16] %v761, 128
  %767 = vxpose.xlu0.b32.cont [2/16] %v763, 128
  %768 = vxpose.xlu0.b32.cont [3/16] 0.0, 128
  %769 = vxpose.xlu0.b32.cont [4/16] 0.0, 128
  %770 = vxpose.xlu0.b32.cont [5/16] 0.0, 128
  %771 = vxpose.xlu0.b32.cont [6/16] 0.0, 128
  %772 = vxpose.xlu0.b32.cont [7/16] 0.0, 128
  %773 = vxpose.xlu0.b32.cont [8/16] 0.0, 128
  %774 = vxpose.xlu0.b32.cont [9/16] 0.0, 128
  %775 = vxpose.xlu0.b32.cont [10/16] 0.0, 128
  %776 = vxpose.xlu0.b32.cont [11/16] 0.0, 128
  %777 = vxpose.xlu0.b32.cont [12/16] 0.0, 128
  %778 = vxpose.xlu0.b32.cont [13/16] 0.0, 128
  %779 = vxpose.xlu0.b32.cont [14/16] 0.0, 128
  %780 = vxpose.xlu0.b32.cont [15/16] 0.0, 128
  %781 = vxpose.xlu0.b32.end [16/16] 0.0, 128
  %v782 = vpop.trf.xlu0
  %v783 = vpop.trf.xlu0
  %v784 = vpop.trf.xlu0
  %v785 = vpop.trf.xlu0
  %v786 = vpop.trf.xlu0
  %v787 = vpop.trf.xlu0
  %v788 = vpop.trf.xlu0
  %v789 = vpop.trf.xlu0
  %v790 = vpop.trf.xlu0
  %v791 = vpop.trf.xlu0
  %v792 = vpop.trf.xlu0
  %v793 = vpop.trf.xlu0
  %v794 = vpop.trf.xlu0
  %v795 = vpop.trf.xlu0
  %v796 = vpop.trf.xlu0
  %v797 = vpop.trf.xlu0
  %798 = vset.pattern.permute.xlu0 0
  %799 = vperm.xlu0 %798, %v750
  %v800 = vpop.permute.xlu0 %799
  %802 = vset.pattern.permute.xlu0 0
  %803 = vperm.xlu0 %802, %v755
  %v804 = vpop.permute.xlu0 %803
  %v806 = vlaneseq
  %v807 = vshrl.u32 %v806, 7
  %v808 = vsub.s32 0, %v807
  %v809 = vrot.slane %v782, %v808
  %v810 = vadd.f32 %v800, %v809
  %v811 = vadd.f32 %v804, %v809
  %v812 = vmul.f32 %v810, 0.2
  %v813 = vmul.f32 %v811, 0.2
  %v814 = vmax.f32 %v810, %v812
  %v815 = vmax.f32 %v811, %v813
  %v816 = vadd.f32 %v814, %v49
  %v817 = vadd.f32 %v815, %v50
  %v818 = vsel %vm282, %v816, -inf
  %819 = vmax.xlane.f32.xlu0 %v818
  %v820 = vpop.xlane.xlu0 %819
  %v821 = vsel %vm282, %v817, -inf
  %822 = vmax.xlane.f32.xlu0 %v821
  %v823 = vpop.xlane.xlu0 %822
  %v824 = vsub.f32 %v816, %v820
  %v825 = vsub.f32 %v817, %v823
  %v826 = vmul.f32 %v824, 1.442695
  %v827 = vpow.pop %v826
  %v828 = vmul.f32 %v825, 1.442695
  %v829 = vpow.pop %v828
  %v830 = vsel %vm282, %v827, 0.0
  %831 = vadd.xlane.f32.xlu0 %v830
  %v832 = vpop.xlane.xlu0 %831
  %v833 = vsel %vm282, %v829, 0.0
  %834 = vadd.xlane.f32.xlu0 %v833
  %v835 = vpop.xlane.xlu0 %834
  %v837 = vsel %vm282, %v827, 0
  %v840 = vsel %vm282, %v829, 0
  %842 = vmatprep.subr.mxu0 0.0
  %843 = vmatpush1.msra.mxu0 %v665
  %844 = vmatprep.subr.mxu0 0.0
  %845 = vmatpush1.msra.mxu0 %v670
  %846 = vmatprep.subr.mxu0 0.0
  %847 = vmatpush1.msra.mxu0 0.0
  %848 = vmatprep.subr.mxu0 0.0
  %849 = vmatpush1.msra.mxu0 0.0
  %850 = vmatprep.subr.mxu0 0.0
  %851 = vmatpush1.msra.mxu0 0.0
  %852 = vmatprep.subr.mxu0 0.0
  %853 = vmatpush1.msra.mxu0 0.0
  %854 = vmatprep.subr.mxu0 0.0
  %855 = vmatpush1.msra.mxu0 0.0
  %856 = vmatprep.subr.mxu0 0.0
  %857 = vmatpush1.msra.mxu0 0.0
  %858 = vmatprep.subr.mxu0 0.0
  %859 = vmatpush1.msra.mxu0 0.0
  %860 = vmatprep.subr.mxu0 0.0
  %861 = vmatpush1.msra.mxu0 0.0
  %862 = vmatprep.subr.mxu0 0.0
  %863 = vmatpush1.msra.mxu0 0.0
  %864 = vmatprep.subr.mxu0 0.0
  %865 = vmatpush1.msra.mxu0 0.0
  %866 = vmatprep.subr.mxu0 0.0
  %867 = vmatpush1.msra.mxu0 0.0
  %868 = vmatprep.subr.mxu0 0.0
  %869 = vmatpush1.msra.mxu0 0.0
  %870 = vmatprep.subr.mxu0 0.0
  %871 = vmatpush1.msra.mxu0 0.0
  %872 = vmatprep.subr.mxu0 0.0
  %873 = vmatpush1.msra.mxu0 0.0
  %874 = vmatprep.subr.mxu0 0.0
  %875 = vmatpush1.msra.mxu0 0.0
  %876 = vmatprep.subr.mxu0 0.0
  %877 = vmatpush1.msra.mxu0 0.0
  %878 = vmatprep.subr.mxu0 0.0
  %879 = vmatpush1.msra.mxu0 0.0
  %880 = vmatprep.subr.mxu0 0.0
  %881 = vmatpush1.msra.mxu0 0.0
  %882 = vmatprep.subr.mxu0 0.0
  %883 = vmatpush1.msra.mxu0 0.0
  %884 = vmatprep.subr.mxu0 0.0
  %885 = vmatpush1.msra.mxu0 0.0
  %886 = vmatprep.subr.mxu0 0.0
  %887 = vmatpush1.msra.mxu0 0.0
  %888 = vmatprep.subr.mxu0 0.0
  %889 = vmatpush1.msra.mxu0 0.0
  %890 = vmatprep.subr.mxu0 0.0
  %891 = vmatpush1.msra.mxu0 0.0
  %892 = vmatprep.subr.mxu0 0.0
  %893 = vmatpush1.msra.mxu0 0.0
  %894 = vmatprep.subr.mxu0 0.0
  %895 = vmatpush1.msra.mxu0 0.0
  %896 = vmatprep.subr.mxu0 0.0
  %897 = vmatpush1.msra.mxu0 0.0
  %898 = vmatprep.subr.mxu0 0.0
  %899 = vmatpush1.msra.mxu0 0.0
  %900 = vmatprep.subr.mxu0 0.0
  %901 = vmatpush1.msra.mxu0 0.0
  %902 = vmatprep.subr.mxu0 0.0
  %903 = vmatpush1.msra.mxu0 0.0
  %904 = vmatprep.subr.mxu0 0.0
  %905 = vmatpush1.msra.mxu0 0.0
  %906 = vmatprep.mubr.f32.mxu0 0.0
  %907 = vmatmul.mubr.f32.gmra.mrb[0].mxu0 %v837
  %v908 = vpop.f32.mrb[0].mxu0
  %v909 = vadd.f32 0.0, %v908
  %v910 = vpop.f32.mrb[0].mxu0
  %911 = vmatprep.mubr.f32.mxu0 0.0
  %912 = vmatmul.mubr.f32.gmra.mrb[0].mxu0 %v840
  %v913 = vpop.f32.mrb[0].mxu0
  %v914 = vadd.f32 0.0, %v913
  %v915 = vpop.f32.mrb[0].mxu0
  %916 = vdwg.mxu0
  %v917 = vrcp.pop %v832
  %v918 = vrcp.pop %v835
  %v919 = vmul.f32 %v909, %v917
  %v920 = vmul.f32 %v914, %v918
  %921 = vst.msk [vmem:[#allocation2] sm:$0xff] %vm282, %v919
  %922 = vst.msk [vmem:[#allocation2 + $0x8] sm:$0xff] %vm282, %v920
  %923 = vrot.lane.b32.xlu0 %v750, 125
  %v924 = vpop.permute.xlu0 %923
  %925 = vrot.lane.b32.xlu0 %v755, 125
  %v926 = vpop.permute.xlu0 %925
  %929 = vxpose.xlu0.b32.start [1/16] %v924, 128
  %930 = vxpose.xlu0.b32.cont [2/16] %v926, 128
  %931 = vxpose.xlu0.b32.cont [3/16] 0.0, 128
  %932 = vxpose.xlu0.b32.cont [4/16] 0.0, 128
  %933 = vxpose.xlu0.b32.cont [5/16] 0.0, 128
  %934 = vxpose.xlu0.b32.cont [6/16] 0.0, 128
  %935 = vxpose.xlu0.b32.cont [7/16] 0.0, 128
  %936 = vxpose.xlu0.b32.cont [8/16] 0.0, 128
  %937 = vxpose.xlu0.b32.cont [9/16] 0.0, 128
  %938 = vxpose.xlu0.b32.cont [10/16] 0.0, 128
  %939 = vxpose.xlu0.b32.cont [11/16] 0.0, 128
  %940 = vxpose.xlu0.b32.cont [12/16] 0.0, 128
  %941 = vxpose.xlu0.b32.cont [13/16] 0.0, 128
  %942 = vxpose.xlu0.b32.cont [14/16] 0.0, 128
  %943 = vxpose.xlu0.b32.cont [15/16] 0.0, 128
  %944 = vxpose.xlu0.b32.end [16/16] 0.0, 128
  %v945 = vpop.trf.xlu0
  %v946 = vpop.trf.xlu0
  %v947 = vpop.trf.xlu0
  %v948 = vpop.trf.xlu0
  %v949 = vpop.trf.xlu0
  %v950 = vpop.trf.xlu0
  %v951 = vpop.trf.xlu0
  %v952 = vpop.trf.xlu0
  %v953 = vpop.trf.xlu0
  %v954 = vpop.trf.xlu0
  %v955 = vpop.trf.xlu0
  %v956 = vpop.trf.xlu0
  %v957 = vpop.trf.xlu0
  %v958 = vpop.trf.xlu0
  %v959 = vpop.trf.xlu0
  %v960 = vpop.trf.xlu0
  %961 = vset.pattern.permute.xlu0 1
  %962 = vperm.xlu0 %961, %v750
  %v963 = vpop.permute.xlu0 %962
  %965 = vset.pattern.permute.xlu0 1
  %966 = vperm.xlu0 %965, %v755
  %v967 = vpop.permute.xlu0 %966
  %v969 = vlaneseq
  %v970 = vshrl.u32 %v969, 7
  %v971 = vsub.s32 0, %v970
  %v972 = vrot.slane %v945, %v971
  %v973 = vadd.f32 %v963, %v972
  %v974 = vadd.f32 %v967, %v972
  %v975 = vmul.f32 %v973, 0.2
  %v976 = vmul.f32 %v974, 0.2
  %v977 = vmax.f32 %v973, %v975
  %v978 = vmax.f32 %v974, %v976
  %v979 = vadd.f32 %v977, %v49
  %v980 = vadd.f32 %v978, %v50
  %v981 = vsel %vm282, %v979, -inf
  %982 = vmax.xlane.f32.xlu0 %v981
  %v983 = vpop.xlane.xlu0 %982
  %v984 = vsel %vm282, %v980, -inf
  %985 = vmax.xlane.f32.xlu0 %v984
  %v986 = vpop.xlane.xlu0 %985
  %v987 = vsub.f32 %v979, %v983
  %v988 = vsub.f32 %v980, %v986
  %v989 = vmul.f32 %v987, 1.442695
  %v990 = vpow.pop %v989
  %v991 = vmul.f32 %v988, 1.442695
  %v992 = vpow.pop %v991
  %v993 = vsel %vm282, %v990, 0.0
  %994 = vadd.xlane.f32.xlu0 %v993
  %v995 = vpop.xlane.xlu0 %994
  %v996 = vsel %vm282, %v992, 0.0
  %997 = vadd.xlane.f32.xlu0 %v996
  %v998 = vpop.xlane.xlu0 %997
  %999 = vrot.lane.b32.xlu0 %v665, 112
  %v1000 = vpop.permute.xlu0 %999
  %1001 = vrot.lane.b32.xlu0 %v670, 112
  %v1002 = vpop.permute.xlu0 %1001
  %v1006 = vsel %vm282, %v990, 0
  %v1009 = vsel %vm282, %v992, 0
  %1011 = vmatprep.subr.mxu0 0.0
  %1012 = vmatpush1.msra.mxu0 %v1000
  %1013 = vmatprep.subr.mxu0 0.0
  %1014 = vmatpush1.msra.mxu0 %v1002
  %1015 = vmatprep.subr.mxu0 0.0
  %1016 = vmatpush1.msra.mxu0 0.0
  %1017 = vmatprep.subr.mxu0 0.0
  %1018 = vmatpush1.msra.mxu0 0.0
  %1019 = vmatprep.subr.mxu0 0.0
  %1020 = vmatpush1.msra.mxu0 0.0
  %1021 = vmatprep.subr.mxu0 0.0
  %1022 = vmatpush1.msra.mxu0 0.0
  %1023 = vmatprep.subr.mxu0 0.0
  %1024 = vmatpush1.msra.mxu0 0.0
  %1025 = vmatprep.subr.mxu0 0.0
  %1026 = vmatpush1.msra.mxu0 0.0
  %1027 = vmatprep.subr.mxu0 0.0
  %1028 = vmatpush1.msra.mxu0 0.0
  %1029 = vmatprep.subr.mxu0 0.0
  %1030 = vmatpush1.msra.mxu0 0.0
  %1031 = vmatprep.subr.mxu0 0.0
  %1032 = vmatpush1.msra.mxu0 0.0
  %1033 = vmatprep.subr.mxu0 0.0
  %1034 = vmatpush1.msra.mxu0 0.0
  %1035 = vmatprep.subr.mxu0 0.0
  %1036 = vmatpush1.msra.mxu0 0.0
  %1037 = vmatprep.subr.mxu0 0.0
  %1038 = vmatpush1.msra.mxu0 0.0
  %1039 = vmatprep.subr.mxu0 0.0
  %1040 = vmatpush1.msra.mxu0 0.0
  %1041 = vmatprep.subr.mxu0 0.0
  %1042 = vmatpush1.msra.mxu0 0.0
  %1043 = vmatprep.subr.mxu0 0.0
  %1044 = vmatpush1.msra.mxu0 0.0
  %1045 = vmatprep.subr.mxu0 0.0
  %1046 = vmatpush1.msra.mxu0 0.0
  %1047 = vmatprep.subr.mxu0 0.0
  %1048 = vmatpush1.msra.mxu0 0.0
  %1049 = vmatprep.subr.mxu0 0.0
  %1050 = vmatpush1.msra.mxu0 0.0
  %1051 = vmatprep.subr.mxu0 0.0
  %1052 = vmatpush1.msra.mxu0 0.0
  %1053 = vmatprep.subr.mxu0 0.0
  %1054 = vmatpush1.msra.mxu0 0.0
  %1055 = vmatprep.subr.mxu0 0.0
  %1056 = vmatpush1.msra.mxu0 0.0
  %1057 = vmatprep.subr.mxu0 0.0
  %1058 = vmatpush1.msra.mxu0 0.0
  %1059 = vmatprep.subr.mxu0 0.0
  %1060 = vmatpush1.msra.mxu0 0.0
  %1061 = vmatprep.subr.mxu0 0.0
  %1062 = vmatpush1.msra.mxu0 0.0
  %1063 = vmatprep.subr.mxu0 0.0
  %1064 = vmatpush1.msra.mxu0 0.0
  %1065 = vmatprep.subr.mxu0 0.0
  %1066 = vmatpush1.msra.mxu0 0.0
  %1067 = vmatprep.subr.mxu0 0.0
  %1068 = vmatpush1.msra.mxu0 0.0
  %1069 = vmatprep.subr.mxu0 0.0
  %1070 = vmatpush1.msra.mxu0 0.0
  %1071 = vmatprep.subr.mxu0 0.0
  %1072 = vmatpush1.msra.mxu0 0.0
  %1073 = vmatprep.subr.mxu0 0.0
  %1074 = vmatpush1.msra.mxu0 0.0
  %1075 = vmatprep.mubr.f32.mxu0 0.0
  %1076 = vmatmul.mubr.f32.gmra.mrb[0].mxu0 %v1006
  %v1077 = vpop.f32.mrb[0].mxu0
  %v1078 = vadd.f32 0.0, %v1077
  %v1079 = vpop.f32.mrb[0].mxu0
  %1080 = vmatprep.mubr.f32.mxu0 0.0
  %1081 = vmatmul.mubr.f32.gmra.mrb[0].mxu0 %v1009
  %v1082 = vpop.f32.mrb[0].mxu0
  %v1083 = vadd.f32 0.0, %v1082
  %v1084 = vpop.f32.mrb[0].mxu0
  %1085 = vdwg.mxu0
  %v1086 = vrcp.pop %v995
  %v1087 = vrcp.pop %v998
  %v1088 = vmul.f32 %v1078, %v1086
  %v1089 = vmul.f32 %v1083, %v1087
  %1092 = vrot.lane.b32.xlu0 %v1088, 16
  %v1093 = vpop.permute.xlu0 %1092
  %1094 = vrot.lane.b32.xlu0 %v1089, 16
  %v1095 = vpop.permute.xlu0 %1094
  %1098 = vst.msk [vmem:[#allocation2] sm:$0xff] %vm563, %v1093
  %1099 = vst.msk [vmem:[#allocation2 + $0x8] sm:$0xff] %vm563, %v1095
  %v1100 = vld [vmem:[#allocation2] sm:$0xff]
  %v1101 = vld [vmem:[#allocation2 + $0x8] sm:$0xff]
  %v1102 = vld [vmem:[%s8] sm:$0x1]
  %v1104 = vlaneseq
  %v1105 = vshrl.u32 %v1104, 7
  %v1106 = vsub.s32 0, %v1105
  %v1107 = vrot.slane %v1102, %v1106
  %v1109 = vmul.f32 %v1100, %v1107
  %v1110 = vmul.f32 %v1101, %v1107
  %v1111 = vld [vmem:[%s9] sm:$0x1]
  %v1113 = vlaneseq
  %v1114 = vshrl.u32 %v1113, 7
  %v1115 = vsub.s32 0, %v1114
  %v1116 = vrot.slane %v1111, %v1115
  %v1118 = vadd.f32 %v1109, %v1116
  %v1119 = vadd.f32 %v1110, %v1116
  %v1120 = vmax.f32 %v1118, 0.0
  %v1121 = vmax.f32 %v1119, 0.0
  %v1122 = vld [vmem:[%s10] sm:$0xff]
  %v1123 = vld [vmem:[%s10 + $0x8] sm:$0xff]
  %v1124 = vld [vmem:[%s10 + $0x10] sm:$0xff]
  %v1125 = vld [vmem:[%s10 + $0x18] sm:$0xff]
  %v1127 = vsel %vm140, %v1120, 0
  %v1130 = vsel %vm140, %v1121, 0
  %1132 = vmatprep.subr.mxu0 0.0
  %1133 = vmatpush1.msra.mxu0 %v1122
  %1134 = vmatprep.subr.mxu0 0.0
  %1135 = vmatpush1.msra.mxu0 %v1123
  %1136 = vmatprep.subr.mxu0 0.0
  %1137 = vmatpush1.msra.mxu0 %v1124
  %1138 = vmatprep.subr.mxu0 0.0
  %1139 = vmatpush1.msra.mxu0 %v1125
  %1140 = vmatprep.subr.mxu0 0.0
  %1141 = vmatpush1.msra.mxu0 0.0
  %1142 = vmatprep.subr.mxu0 0.0
  %1143 = vmatpush1.msra.mxu0 0.0
  %1144 = vmatprep.subr.mxu0 0.0
  %1145 = vmatpush1.msra.mxu0 0.0
  %1146 = vmatprep.subr.mxu0 0.0
  %1147 = vmatpush1.msra.mxu0 0.0
  %1148 = vmatprep.subr.mxu0 0.0
  %1149 = vmatpush1.msra.mxu0 0.0
  %1150 = vmatprep.subr.mxu0 0.0
  %1151 = vmatpush1.msra.mxu0 0.0
  %1152 = vmatprep.subr.mxu0 0.0
  %1153 = vmatpush1.msra.mxu0 0.0
  %1154 = vmatprep.subr.mxu0 0.0
  %1155 = vmatpush1.msra.mxu0 0.0
  %1156 = vmatprep.subr.mxu0 0.0
  %1157 = vmatpush1.msra.mxu0 0.0
  %1158 = vmatprep.subr.mxu0 0.0
  %1159 = vmatpush1.msra.mxu0 0.0
  %1160 = vmatprep.subr.mxu0 0.0
  %1161 = vmatpush1.msra.mxu0 0.0
  %1162 = vmatprep.subr.mxu0 0.0
  %1163 = vmatpush1.msra.mxu0 0.0
  %1164 = vmatprep.subr.mxu0 0.0
  %1165 = vmatpush1.msra.mxu0 0.0
  %1166 = vmatprep.subr.mxu0 0.0
  %1167 = vmatpush1.msra.mxu0 0.0
  %1168 = vmatprep.subr.mxu0 0.0
  %1169 = vmatpush1.msra.mxu0 0.0
  %1170 = vmatprep.subr.mxu0 0.0
  %1171 = vmatpush1.msra.mxu0 0.0
  %1172 = vmatprep.subr.mxu0 0.0
  %1173 = vmatpush1.msra.mxu0 0.0
  %1174 = vmatprep.subr.mxu0 0.0
  %1175 = vmatpush1.msra.mxu0 0.0
  %1176 = vmatprep.subr.mxu0 0.0
  %1177 = vmatpush1.msra.mxu0 0.0
  %1178 = vmatprep.subr.mxu0 0.0
  %1179 = vmatpush1.msra.mxu0 0.0
  %1180 = vmatprep.subr.mxu0 0.0
  %1181 = vmatpush1.msra.mxu0 0.0
  %1182 = vmatprep.subr.mxu0 0.0
  %1183 = vmatpush1.msra.mxu0 0.0
  %1184 = vmatprep.subr.mxu0 0.0
  %1185 = vmatpush1.msra.mxu0 0.0
  %1186 = vmatprep.subr.mxu0 0.0
  %1187 = vmatpush1.msra.mxu0 0.0
  %1188 = vmatprep.subr.mxu0 0.0
  %1189 = vmatpush1.msra.mxu0 0.0
  %1190 = vmatprep.subr.mxu0 0.0
  %1191 = vmatpush1.msra.mxu0 0.0
  %1192 = vmatprep.subr.mxu0 0.0
  %1193 = vmatpush1.msra.mxu0 0.0
  %1194 = vmatprep.subr.mxu0 0.0
  %1195 = vmatpush1.msra.mxu0 0.0
  %1196 = vmatprep.mubr.f32.mxu0 0.0
  %1197 = vmatmul.mubr.f32.gmra.mrb[0].mxu0 %v1127
  %v1198 = vpop.f32.mrb[0].mxu0
  %v1199 = vadd.f32 0.0, %v1198
  %v1200 = vpop.f32.mrb[0].mxu0
  %1201 = vmatprep.mubr.f32.mxu0 0.0
  %1202 = vmatmul.mubr.f32.gmra.mrb[0].mxu0 %v1130
  %v1203 = vpop.f32.mrb[0].mxu0
  %v1204 = vadd.f32 0.0, %v1203
  %v1205 = vpop.f32.mrb[0].mxu0
  %1206 = vdwg.mxu0
  %v1207 = vld [vmem:[%s11] sm:$0xff]
  %v1208 = vld [vmem:[%s11 + $0x8] sm:$0xff]
  %v1209 = vld [vmem:[%s11 + $0x10] sm:$0xff]
  %v1210 = vld [vmem:[%s11 + $0x18] sm:$0xff]
  %v1211 = vld [vmem:[%s11 + $0x20] sm:$0xff]
  %v1212 = vld [vmem:[%s11 + $0x28] sm:$0xff]
  %v1213 = vld [vmem:[%s11 + $0x30] sm:$0xff]
  %v1214 = vld [vmem:[%s11 + $0x38] sm:$0xff]
  %v1215 = vld [vmem:[%s11 + $0x40] sm:$0xff]
  %v1216 = vld [vmem:[%s11 + $0x48] sm:$0xff]
  %v1217 = vld [vmem:[%s11 + $0x50] sm:$0xff]
  %v1218 = vld [vmem:[%s11 + $0x58] sm:$0xff]
  %v1219 = vld [vmem:[%s11 + $0x60] sm:$0xff]
  %v1220 = vld [vmem:[%s11 + $0x68] sm:$0xff]
  %v1221 = vld [vmem:[%s11 + $0x70] sm:$0xff]
  %v1222 = vld [vmem:[%s11 + $0x78] sm:$0xff]
  %1223 = vmatprep.subr.mxu0 0.0
  %1224 = vmatpush1.msra.mxu0 %v1207
  %1225 = vmatprep.subr.mxu0 0.0
  %1226 = vmatpush1.msra.mxu0 %v1208
  %1227 = vmatprep.subr.mxu0 0.0
  %1228 = vmatpush1.msra.mxu0 %v1209
  %1229 = vmatprep.subr.mxu0 0.0
  %1230 = vmatpush1.msra.mxu0 %v1210
  %1231 = vmatprep.subr.mxu0 0.0
  %1232 = vmatpush1.msra.mxu0 %v1211
  %1233 = vmatprep.subr.mxu0 0.0
  %1234 = vmatpush1.msra.mxu0 %v1212
  %1235 = vmatprep.subr.mxu0 0.0
  %1236 = vmatpush1.msra.mxu0 %v1213
  %1237 = vmatprep.subr.mxu0 0.0
  %1238 = vmatpush1.msra.mxu0 %v1214
  %1239 = vmatprep.subr.mxu0 0.0
  %1240 = vmatpush1.msra.mxu0 %v1215
  %1241 = vmatprep.subr.mxu0 0.0
  %1242 = vmatpush1.msra.mxu0 %v1216
  %1243 = vmatprep.subr.mxu0 0.0
  %1244 = vmatpush1.msra.mxu0 %v1217
  %1245 = vmatprep.subr.mxu0 0.0
  %1246 = vmatpush1.msra.mxu0 %v1218
  %1247 = vmatprep.subr.mxu0 0.0
  %1248 = vmatpush1.msra.mxu0 %v1219
  %1249 = vmatprep.subr.mxu0 0.0
  %1250 = vmatpush1.msra.mxu0 %v1220
  %1251 = vmatprep.subr.mxu0 0.0
  %1252 = vmatpush1.msra.mxu0 %v1221
  %1253 = vmatprep.subr.mxu0 0.0
  %1254 = vmatpush1.msra.mxu0 %v1222
  %1255 = vmatprep.subr.mxu0 0.0
  %1256 = vmatpush1.msra.mxu0 0.0
  %1257 = vmatprep.subr.mxu0 0.0
  %1258 = vmatpush1.msra.mxu0 0.0
  %1259 = vmatprep.subr.mxu0 0.0
  %1260 = vmatpush1.msra.mxu0 0.0
  %1261 = vmatprep.subr.mxu0 0.0
  %1262 = vmatpush1.msra.mxu0 0.0
  %1263 = vmatprep.subr.mxu0 0.0
  %1264 = vmatpush1.msra.mxu0 0.0
  %1265 = vmatprep.subr.mxu0 0.0
  %1266 = vmatpush1.msra.mxu0 0.0
  %1267 = vmatprep.subr.mxu0 0.0
  %1268 = vmatpush1.msra.mxu0 0.0
  %1269 = vmatprep.subr.mxu0 0.0
  %1270 = vmatpush1.msra.mxu0 0.0
  %1271 = vmatprep.subr.mxu0 0.0
  %1272 = vmatpush1.msra.mxu0 0.0
  %1273 = vmatprep.subr.mxu0 0.0
  %1274 = vmatpush1.msra.mxu0 0.0
  %1275 = vmatprep.subr.mxu0 0.0
  %1276 = vmatpush1.msra.mxu0 0.0
  %1277 = vmatprep.subr.mxu0 0.0
  %1278 = vmatpush1.msra.mxu0 0.0
  %1279 = vmatprep.subr.mxu0 0.0
  %1280 = vmatpush1.msra.mxu0 0.0
  %1281 = vmatprep.subr.mxu0 0.0
  %1282 = vmatpush1.msra.mxu0 0.0
  %1283 = vmatprep.subr.mxu0 0.0
  %1284 = vmatpush1.msra.mxu0 0.0
  %1285 = vmatprep.subr.mxu0 0.0
  %1286 = vmatpush1.msra.mxu0 0.0
  %1287 = vmatprep.mubr.f32.mxu0 0.0
  %1288 = vmatmul.mubr.f32.gmra.mrb[0].mxu0 %v1199
  %v1289 = vpop.f32.mrb[0].mxu0
  %v1290 = vadd.f32 0.0, %v1289
  %v1291 = vpop.f32.mrb[0].mxu0
  %1292 = vmatprep.mubr.f32.mxu0 0.0
  %1293 = vmatmul.mubr.f32.gmra.mrb[0].mxu0 %v1204
  %v1294 = vpop.f32.mrb[0].mxu0
  %v1295 = vadd.f32 0.0, %v1294
  %v1296 = vpop.f32.mrb[0].mxu0
  %1297 = vdwg.mxu0
  %1300 = vrot.lane.b32.xlu0 %v1290, 127
  %v1301 = vpop.permute.xlu0 %1300
  %1302 = vrot.lane.b32.xlu0 %v1295, 127
  %v1303 = vpop.permute.xlu0 %1302
  %1306 = vxpose.xlu0.b32.start [1/16] %v1301, 128
  %1307 = vxpose.xlu0.b32.cont [2/16] %v1303, 128
  %1308 = vxpose.xlu0.b32.cont [3/16] 0.0, 128
  %1309 = vxpose.xlu0.b32.cont [4/16] 0.0, 128
  %1310 = vxpose.xlu0.b32.cont [5/16] 0.0, 128
  %1311 = vxpose.xlu0.b32.cont [6/16] 0.0, 128
  %1312 = vxpose.xlu0.b32.cont [7/16] 0.0, 128
  %1313 = vxpose.xlu0.b32.cont [8/16] 0.0, 128
  %1314 = vxpose.xlu0.b32.cont [9/16] 0.0, 128
  %1315 = vxpose.xlu0.b32.cont [10/16] 0.0, 128
  %1316 = vxpose.xlu0.b32.cont [11/16] 0.0, 128
  %1317 = vxpose.xlu0.b32.cont [12/16] 0.0, 128
  %1318 = vxpose.xlu0.b32.cont [13/16] 0.0, 128
  %1319 = vxpose.xlu0.b32.cont [14/16] 0.0, 128
  %1320 = vxpose.xlu0.b32.cont [15/16] 0.0, 128
  %1321 = vxpose.xlu0.b32.end [16/16] 0.0, 128
  %v1322 = vpop.trf.xlu0
  %v1323 = vpop.trf.xlu0
  %v1324 = vpop.trf.xlu0
  %v1325 = vpop.trf.xlu0
  %v1326 = vpop.trf.xlu0
  %v1327 = vpop.trf.xlu0
  %v1328 = vpop.trf.xlu0
  %v1329 = vpop.trf.xlu0
  %v1330 = vpop.trf.xlu0
  %v1331 = vpop.trf.xlu0
  %v1332 = vpop.trf.xlu0
  %v1333 = vpop.trf.xlu0
  %v1334 = vpop.trf.xlu0
  %v1335 = vpop.trf.xlu0
  %v1336 = vpop.trf.xlu0
  %v1337 = vpop.trf.xlu0
  %1338 = vset.pattern.permute.xlu0 0
  %1339 = vperm.xlu0 %1338, %v1290
  %v1340 = vpop.permute.xlu0 %1339
  %1342 = vset.pattern.permute.xlu0 0
  %1343 = vperm.xlu0 %1342, %v1295
  %v1344 = vpop.permute.xlu0 %1343
  %v1346 = vlaneseq
  %v1347 = vshrl.u32 %v1346, 7
  %v1348 = vsub.s32 0, %v1347
  %v1349 = vrot.slane %v1322, %v1348
  %v1350 = vadd.f32 %v1340, %v1349
  %v1351 = vadd.f32 %v1344, %v1349
  %v1352 = vmul.f32 %v1350, 0.2
  %v1353 = vmul.f32 %v1351, 0.2
  %v1354 = vmax.f32 %v1350, %v1352
  %v1355 = vmax.f32 %v1351, %v1353
  %v1356 = vadd.f32 %v1354, %v49
  %v1357 = vadd.f32 %v1355, %v50
  %v1358 = vsel %vm282, %v1356, -inf
  %1359 = vmax.xlane.f32.xlu0 %v1358
  %v1360 = vpop.xlane.xlu0 %1359
  %v1361 = vsel %vm282, %v1357, -inf
  %1362 = vmax.xlane.f32.xlu0 %v1361
  %v1363 = vpop.xlane.xlu0 %1362
  %v1364 = vsub.f32 %v1356, %v1360
  %v1365 = vsub.f32 %v1357, %v1363
  %v1366 = vmul.f32 %v1364, 1.442695
  %v1367 = vpow.pop %v1366
  %v1368 = vmul.f32 %v1365, 1.442695
  %v1369 = vpow.pop %v1368
  %v1370 = vsel %vm282, %v1367, 0.0
  %1371 = vadd.xlane.f32.xlu0 %v1370
  %v1372 = vpop.xlane.xlu0 %1371
  %v1373 = vsel %vm282, %v1369, 0.0
  %1374 = vadd.xlane.f32.xlu0 %v1373
  %v1375 = vpop.xlane.xlu0 %1374
  %v1377 = vsel %vm282, %v1367, 0
  %v1380 = vsel %vm282, %v1369, 0
  %1382 = vmatprep.subr.mxu0 0.0
  %1383 = vmatpush1.msra.mxu0 %v1199
  %1384 = vmatprep.subr.mxu0 0.0
  %1385 = vmatpush1.msra.mxu0 %v1204
  %1386 = vmatprep.subr.mxu0 0.0
  %1387 = vmatpush1.msra.mxu0 0.0
  %1388 = vmatprep.subr.mxu0 0.0
  %1389 = vmatpush1.msra.mxu0 0.0
  %1390 = vmatprep.subr.mxu0 0.0
  %1391 = vmatpush1.msra.mxu0 0.0
  %1392 = vmatprep.subr.mxu0 0.0
  %1393 = vmatpush1.msra.mxu0 0.0
  %1394 = vmatprep.subr.mxu0 0.0
  %1395 = vmatpush1.msra.mxu0 0.0
  %1396 = vmatprep.subr.mxu0 0.0
  %1397 = vmatpush1.msra.mxu0 0.0
  %1398 = vmatprep.subr.mxu0 0.0
  %1399 = vmatpush1.msra.mxu0 0.0
  %1400 = vmatprep.subr.mxu0 0.0
  %1401 = vmatpush1.msra.mxu0 0.0
  %1402 = vmatprep.subr.mxu0 0.0
  %1403 = vmatpush1.msra.mxu0 0.0
  %1404 = vmatprep.subr.mxu0 0.0
  %1405 = vmatpush1.msra.mxu0 0.0
  %1406 = vmatprep.subr.mxu0 0.0
  %1407 = vmatpush1.msra.mxu0 0.0
  %1408 = vmatprep.subr.mxu0 0.0
  %1409 = vmatpush1.msra.mxu0 0.0
  %1410 = vmatprep.subr.mxu0 0.0
  %1411 = vmatpush1.msra.mxu0 0.0
  %1412 = vmatprep.subr.mxu0 0.0
  %1413 = vmatpush1.msra.mxu0 0.0
  %1414 = vmatprep.subr.mxu0 0.0
  %1415 = vmatpush1.msra.mxu0 0.0
  %1416 = vmatprep.subr.mxu0 0.0
  %1417 = vmatpush1.msra.mxu0 0.0
  %1418 = vmatprep.subr.mxu0 0.0
  %1419 = vmatpush1.msra.mxu0 0.0
  %1420 = vmatprep.subr.mxu0 0.0
  %1421 = vmatpush1.msra.mxu0 0.0
  %1422 = vmatprep.subr.mxu0 0.0
  %1423 = vmatpush1.msra.mxu0 0.0
  %1424 = vmatprep.subr.mxu0 0.0
  %1425 = vmatpush1.msra.mxu0 0.0
  %1426 = vmatprep.subr.mxu0 0.0
  %1427 = vmatpush1.msra.mxu0 0.0
  %1428 = vmatprep.subr.mxu0 0.0
  %1429 = vmatpush1.msra.mxu0 0.0
  %1430 = vmatprep.subr.mxu0 0.0
  %1431 = vmatpush1.msra.mxu0 0.0
  %1432 = vmatprep.subr.mxu0 0.0
  %1433 = vmatpush1.msra.mxu0 0.0
  %1434 = vmatprep.subr.mxu0 0.0
  %1435 = vmatpush1.msra.mxu0 0.0
  %1436 = vmatprep.subr.mxu0 0.0
  %1437 = vmatpush1.msra.mxu0 0.0
  %1438 = vmatprep.subr.mxu0 0.0
  %1439 = vmatpush1.msra.mxu0 0.0
  %1440 = vmatprep.subr.mxu0 0.0
  %1441 = vmatpush1.msra.mxu0 0.0
  %1442 = vmatprep.subr.mxu0 0.0
  %1443 = vmatpush1.msra.mxu0 0.0
  %1444 = vmatprep.subr.mxu0 0.0
  %1445 = vmatpush1.msra.mxu0 0.0
  %1446 = vmatprep.mubr.f32.mxu0 0.0
  %1447 = vmatmul.mubr.f32.gmra.mrb[0].mxu0 %v1377
  %v1448 = vpop.f32.mrb[0].mxu0
  %v1449 = vadd.f32 0.0, %v1448
  %v1450 = vpop.f32.mrb[0].mxu0
  %1451 = vmatprep.mubr.f32.mxu0 0.0
  %1452 = vmatmul.mubr.f32.gmra.mrb[0].mxu0 %v1380
  %v1453 = vpop.f32.mrb[0].mxu0
  %v1454 = vadd.f32 0.0, %v1453
  %v1455 = vpop.f32.mrb[0].mxu0
  %1456 = vdwg.mxu0
  %v1457 = vrcp.pop %v1372
  %v1458 = vrcp.pop %v1375
  %v1459 = vmul.f32 %v1449, %v1457
  %v1460 = vmul.f32 %v1454, %v1458
  %1461 = vst [vmem:[#allocation2] sm:$0xff] %v1459
  %1462 = vst [vmem:[#allocation2 + $0x8] sm:$0xff] %v1460
  %v1463 = vld [vmem:[#allocation2] sm:$0xff]
  %v1464 = vld [vmem:[#allocation2 + $0x8] sm:$0xff]
  %v1465 = vld [vmem:[%s12] sm:$0x1]
  %v1467 = vlaneseq
  %v1468 = vshrl.u32 %v1467, 7
  %v1469 = vsub.s32 0, %v1468
  %v1470 = vrot.slane %v1465, %v1469
  %v1472 = vmul.f32 %v1463, %v1470
  %v1473 = vmul.f32 %v1464, %v1470
  %v1474 = vld [vmem:[%s13] sm:$0x1]
  %v1476 = vlaneseq
  %v1477 = vshrl.u32 %v1476, 7
  %v1478 = vsub.s32 0, %v1477
  %v1479 = vrot.slane %v1474, %v1478
  %v1481 = vadd.f32 %v1472, %v1479
  %v1482 = vadd.f32 %v1473, %v1479
  %v1483 = vmax.f32 %v1481, 0.0
  %v1484 = vmax.f32 %v1482, 0.0
  %1485 = vst [vmem:[%s14] sm:$0xff] %v1483
  %1486 = vst [vmem:[%s14 + $0x8] sm:$0xff] %v1484
  // Predicated region
  $region58: #{gat_l3_forward.1} parent=0 // pred_check
    _
  $region59: #{gat_l3_forward.1} parent=0 // pred_check_branch
    %1488 = sbr.rel (0) target = $region61
  $region60: #{gat_l3_forward.1} parent=0 // pred_region
    _
  $region61: #{gat_l3_forward.1} parent=0 // pred_fallthru
    _
  // Predicated region
  $region62: #{gat_l3_forward.1} parent=0 // pred_check
    _
  $region63: #{gat_l3_forward.1} parent=0 // pred_check_branch
    %1490 = sbr.rel (0) target = $region65
  $region64: #{gat_l3_forward.1} parent=0 // pred_region
    _
  $region65: #{gat_l3_forward.1} parent=0 // pred_fallthru
    _

</llo_original>
